<compile_context>
chip_gen: v5e
topology: v5e:2x2
jax: 0.10.0
libtpu: 0.0.40
codegen_flags: <defaults>
</compile_context>

<pallas_src>
import math
import functools

import numpy as np
import jax
import jax.numpy as jnp
from jax.experimental import pallas as pl
from jax.experimental.pallas import tpu as pltpu


# ----------------------------------------------------------------------------
# In-kernel helpers (traced inside Pallas kernels)
# ----------------------------------------------------------------------------
def _layer_norm(x, g, b, eps=1e-5):
    mu = jnp.mean(x, axis=-1, keepdims=True)
    var = jnp.mean(jnp.square(x - mu), axis=-1, keepdims=True)
    return (x - mu) * jax.lax.rsqrt(var + eps) * g + b


def _softmax_rows(s):
    s = s - jnp.max(s, axis=-1, keepdims=True)
    e = jnp.exp(s)
    # reciprocal on the EUP slot (free relative to the VPU), multiply instead of divide
    return e * pl.reciprocal(jnp.sum(e, axis=-1, keepdims=True), approx=True)


def _shift_rows(x, d):
    # Row t of the result holds x[t + d]; out-of-range rows are zero ('same' padding).
    # Static slice + zero concat along the sublane (time) axis: no MXU work, no
    # (S, S) shift-matrix constants in VMEM.
    S, C = x.shape
    if d == 0:
        return x
    z = jnp.zeros((abs(d), C), x.dtype)
    if d > 0:
        return jnp.concatenate([x[d:, :], z], axis=0)
    return jnp.concatenate([z, x[:S + d, :]], axis=0)


def _conv_same(x, w_ref, bias):
    # 'same' conv1d over time: y[t] = sum_k x[t + k - pad] @ W[k] + b
    K = w_ref.shape[0]
    pad = K // 2
    acc = None
    for k in range(K):
        t = jnp.dot(_shift_rows(x, k - pad), w_ref[k],
                    preferred_element_type=jnp.float32)
        acc = t if acc is None else acc + t
    return acc + bias


# ----------------------------------------------------------------------------
# Pallas kernels
# ----------------------------------------------------------------------------
def fft_block_kernel(x_ref, mask_ref, wqkv_ref, bqkv_ref, wo_ref, bo_ref,
                     g1_ref, be1_ref, wc1_ref, bc1_ref, wc2_ref, bc2_ref,
                     g2_ref, be2_ref, o_ref, *, n_heads, d_model):
    """One FFT block (MHA + add&LN + conv-relu-conv + add&LN) for one batch item."""
    x = x_ref[0]          # (S, H)
    m = mask_ref[0]       # (S, 1), 1.0 = valid query position
    dh = d_model // n_heads
    inv_sqrt = 1.0 / math.sqrt(d_model)

    # fused QKV projection: one (S, H) @ (H, 3H) matmul
    qkv = jnp.dot(x, wqkv_ref[...], preferred_element_type=jnp.float32) + bqkv_ref[...]

    attn = None
    for h in range(n_heads):
        q = qkv[:, h * dh:(h + 1) * dh]
        k = qkv[:, d_model + h * dh:d_model + (h + 1) * dh]
        v = qkv[:, 2 * d_model + h * dh:2 * d_model + (h + 1) * dh]
        # (S, S) scores, contracting the head dim (trans_b form, no explicit transpose)
        s = jax.lax.dot_general(q, k, (((1,), (1,)), ((), ())),
                                preferred_element_type=jnp.float32) * inv_sqrt
        # PyTorch does QK[~mask] = -1e9 with a (B, S) boolean mask -> masks whole
        # query rows; replicate that (broadcast (S,1) condition over keys).
        s = jnp.where(m > 0.5, s, -1e9)
        p = _softmax_rows(s)
        ctx = jnp.dot(p, v, preferred_element_type=jnp.float32)          # (S, dh)
        # accumulate the output projection per head (no concatenate of heads)
        part = jnp.dot(ctx, wo_ref[h], preferred_element_type=jnp.float32)
        attn = part if attn is None else attn + part
    attn = attn + bo_ref[...]

    h1 = _layer_norm(attn + x, g1_ref[...], be1_ref[...])      # norm_1 (dropout = id)

    c = _conv_same(h1, wc1_ref, bc1_ref[...])
    c = jnp.maximum(c, 0.0)
    c = _conv_same(c, wc2_ref, bc2_ref[...])

    h2 = _layer_norm(c + h1, g2_ref[...], be2_ref[...])         # norm_2 (dropout = id)
    o_ref[0] = h2


def length_regulator_kernel(x_ref, wc1_ref, bc1_ref, g1_ref, be1_ref,
                            wc2_ref, bc2_ref, g2_ref, be2_ref,
                            wl_ref, bl_ref, o_ref):
    """conv -> LN -> ReLU -> conv -> LN -> ReLU -> Linear(H,1) -> ReLU -> exp."""
    x = x_ref[0]                                                # (S, H)
    c = _conv_same(x, wc1_ref, bc1_ref[...])
    c = _layer_norm(c, g1_ref[...], be1_ref[...])
    c = jnp.maximum(c, 0.0)
    c = _conv_same(c, wc2_ref, bc2_ref[...])
    c = _layer_norm(c, g2_ref[...], be2_ref[...])
    c = jnp.maximum(c, 0.0)
    d = jnp.sum(c * wl_ref[...], axis=-1, keepdims=True) + bl_ref[...]   # Linear(H, 1)
    d = jnp.maximum(d, 0.0)
    o_ref[0] = jnp.exp(d)                                       # durations (S, 1)


def final_linear_kernel(y_ref, wt_ref, bt_ref, o_ref):
    """Mel projection computed transposed: output (n_mels, T) with T on lanes."""
    y = y_ref[0]                                                # (T, H)
    m = jax.lax.dot_general(wt_ref[...], y, (((1,), (1,)), ((), ())),
                            preferred_element_type=jnp.float32)  # (n_mels, T)
    o_ref[0] = m + bt_ref[...]


# ----------------------------------------------------------------------------
# Wrappers calling pallas_call
# ----------------------------------------------------------------------------
def _const_spec(shape):
    nd = len(shape)
    return pl.BlockSpec(shape, lambda *args, _nd=nd: (0,) * _nd)


def fft_block(x, mask_f, p, n_heads):
    B, S, H = x.shape
    K = p['wc1'].shape[0]
    F = p['wc1'].shape[2]
    dh = H // n_heads

    in_specs = [
        pl.BlockSpec((1, S, H), lambda b: (b, 0, 0)),      # x
        pl.BlockSpec((1, S, 1), lambda b: (b, 0, 0)),      # mask
        _const_spec((H, 3 * H)), _const_spec((1, 3 * H)),  # fused Wqkv, bqkv
        _const_spec((n_heads, dh, H)), _const_spec((1, H)),  # Wo (per-head rows), bo
        _const_spec((1, H)), _const_spec((1, H)),          # LN1 gamma, beta
        _const_spec((K, H, F)), _const_spec((1, F)),       # conv1
        _const_spec((K, F, H)), _const_spec((1, H)),       # conv2
        _const_spec((1, H)), _const_spec((1, H)),          # LN2 gamma, beta
    ]
    out_specs = pl.BlockSpec((1, S, H), lambda b: (b, 0, 0))

    return pl.pallas_call(
        functools.partial(fft_block_kernel, n_heads=n_heads, d_model=H),
        out_shape=jax.ShapeDtypeStruct((B, S, H), jnp.float32),
        grid_spec=pltpu.PrefetchScalarGridSpec(
            num_scalar_prefetch=0, grid=(B,),
            in_specs=in_specs, out_specs=out_specs),
        compiler_params=pltpu.CompilerParams(dimension_semantics=("parallel",)),
    )(x, mask_f,
      p['wqkv'], p['bqkv'], p['wo'], p['bo'], p['g1'], p['be1'],
      p['wc1'], p['bc1'], p['wc2'], p['bc2'], p['g2'], p['be2'])


def length_regulator(x, p):
    B, S, H = x.shape
    K = p['wc1'].shape[0]

    in_specs = [
        pl.BlockSpec((1, S, H), lambda b: (b, 0, 0)),
        _const_spec((K, H, H)), _const_spec((1, H)),
        _const_spec((1, H)), _const_spec((1, H)),
        _const_spec((K, H, H)), _const_spec((1, H)),
        _const_spec((1, H)), _const_spec((1, H)),
        _const_spec((1, H)), _const_spec((1, 1)),
    ]
    out_specs = pl.BlockSpec((1, S, 1), lambda b: (b, 0, 0))

    out = pl.pallas_call(
        length_regulator_kernel,
        out_shape=jax.ShapeDtypeStruct((B, S, 1), jnp.float32),
        grid_spec=pltpu.PrefetchScalarGridSpec(
            num_scalar_prefetch=0, grid=(B,),
            in_specs=in_specs, out_specs=out_specs),
        compiler_params=pltpu.CompilerParams(dimension_semantics=("parallel",)),
    )(x, p['wc1'], p['bc1'], p['g1'], p['be1'],
      p['wc2'], p['bc2'], p['g2'], p['be2'], p['wl'], p['bl'])
    return out[..., 0]                      # (B, S) durations = exp(net(x))


def final_linear(y, w_t, b_t):
    B, T, H = y.shape
    M = w_t.shape[0]
    return pl.pallas_call(
        final_linear_kernel,
        out_shape=jax.ShapeDtypeStruct((B, M, T), jnp.float32),
        grid_spec=pltpu.PrefetchScalarGridSpec(
            num_scalar_prefetch=0, grid=(B,),
            in_specs=[pl.BlockSpec((1, T, H), lambda b: (b, 0, 0)),
                      _const_spec((M, H)),
                      _const_spec((M, 1))],
            out_specs=pl.BlockSpec((1, M, T), lambda b: (b, 0, 0))),
        compiler_params=pltpu.CompilerParams(dimension_semantics=("parallel",)),
    )(y, w_t, b_t)


# ----------------------------------------------------------------------------
# Parameter construction (deterministic, shapes from the PyTorch __init__)
# ----------------------------------------------------------------------------
def _uniform(key, shape, bound):
    return jax.random.uniform(key, shape, jnp.float32, -bound, bound)


def init_fft_block_params(key, H, n_heads, F, K):
    dh = H // n_heads
    ks = jax.random.split(key, 8)
    bH = 1.0 / math.sqrt(H)
    bc1 = 1.0 / math.sqrt(H * K)
    bc2 = 1.0 / math.sqrt(F * K)
    return dict(
        wqkv=_uniform(ks[0], (H, 3 * H), bH),          # [Q heads | K heads | V heads]
        bqkv=_uniform(ks[1], (1, 3 * H), bH),
        wo=_uniform(ks[2], (n_heads, dh, H), bH),
        bo=_uniform(ks[3], (1, H), bH),
        g1=jnp.ones((1, H), jnp.float32), be1=jnp.zeros((1, H), jnp.float32),
        wc1=_uniform(ks[4], (K, H, F), bc1), bc1=_uniform(ks[5], (1, F), bc1),
        wc2=_uniform(ks[6], (K, F, H), bc2), bc2=_uniform(ks[7], (1, H), bc2),
        g2=jnp.ones((1, H), jnp.float32), be2=jnp.zeros((1, H), jnp.float32),
    )


def init_length_regulator_params(key, H, K):
    ks = jax.random.split(key, 6)
    bc = 1.0 / math.sqrt(H * K)
    bl = 1.0 / math.sqrt(H)
    return dict(
        wc1=_uniform(ks[0], (K, H, H), bc), bc1=_uniform(ks[1], (1, H), bc),
        g1=jnp.ones((1, H), jnp.float32), be1=jnp.zeros((1, H), jnp.float32),
        wc2=_uniform(ks[2], (K, H, H), bc), bc2=_uniform(ks[3], (1, H), bc),
        g2=jnp.ones((1, H), jnp.float32), be2=jnp.zeros((1, H), jnp.float32),
        wl=_uniform(ks[4], (1, H), bl), bl=_uniform(ks[5], (1, 1), bl),
    )


def make_positional_encoding(d_model, max_len=2000):
    pos = np.arange(max_len)[:, None].astype(np.float64)
    freq = np.exp(np.arange(0, d_model, 2) * (-math.log(10000.0) / d_model))
    pe = np.zeros((max_len, d_model), np.float32)
    pe[:, 0::2] = np.sin(pos * freq)
    pe[:, 1::2] = np.cos(pos * freq)
    return jnp.asarray(pe)


def init_model(key, cfg):
    H = cfg['hidden_size']
    K = cfg['kernel_size']
    F = cfg['filter_size']
    nH = cfg['num_heads']
    n_blocks = cfg['n_encoder_blocks'] + cfg['n_decoder_blocks']
    ks = jax.random.split(key, n_blocks + 4)
    emb = jax.random.normal(ks[0], (cfg['n_phonemes'], H), jnp.float32)
    enc = [init_fft_block_params(ks[1 + i], H, nH, F, K)
           for i in range(cfg['n_encoder_blocks'])]
    dec = [init_fft_block_params(ks[1 + cfg['n_encoder_blocks'] + i], H, nH, F, K)
           for i in range(cfg['n_decoder_blocks'])]
    lr = init_length_regulator_params(ks[-3], H, K)
    bm = 1.0 / math.sqrt(H)
    w_melT = _uniform(ks[-2], (cfg['n_mels'], H), bm)   # stored transposed: (n_mels, H)
    b_melT = _uniform(ks[-1], (cfg['n_mels'], 1), bm)
    return dict(emb=emb, pe=make_positional_encoding(H), encoder=enc, decoder=dec,
                lr=lr, w_melT=w_melT, b_melT=b_melT)


# ----------------------------------------------------------------------------
# FastSpeech forward
# ----------------------------------------------------------------------------
def fastspeech_forward(params, tokens, mask_bool_np, cfg):
    B, S = tokens.shape
    nH = cfg['num_heads']

    mask_bool = jnp.asarray(mask_bool_np)
    mask_f = mask_bool.astype(jnp.float32)[:, :, None]          # (B, S, 1)

    # embedding + positional encoding 1 (glue)
    x = jnp.take(params['emb'], tokens, axis=0)                 # (B, S, H)
    x = x + params['pe'][:S]

    for bp in params['encoder']:
        x = fft_block(x, mask_f, bp, nH)

    durations_pred = length_regulator(x, params['lr'])          # (B, S)

    # ---- alignment: repeat_interleave + pad_sequence ----
    # TODO(synk): the output length is data-dependent (no static-shape Pallas
    # equivalent); duration rounding + gather-index construction stay on host,
    # but the activation gather itself runs on device (x never leaves the TPU).
    dur_np = np.round(np.asarray(jax.device_get(durations_pred))).astype(np.int64)
    dur_np = np.maximum(dur_np, 0)
    mask_np = np.asarray(mask_bool_np)
    lengths = dur_np.sum(axis=1)
    T = int(lengths.max())
    idx_np = np.zeros((B, T), np.int32)
    valid_np = np.zeros((B, T), bool)
    mel_mask_np = np.zeros((B, T), bool)
    for b in range(B):
        rep = np.repeat(np.arange(S), dur_np[b])
        L = rep.shape[0]
        idx_np[b, :L] = rep
        valid_np[b, :L] = True
        mel_mask_np[b, :L] = mask_np[b, rep]

    idx = jnp.asarray(idx_np)[:, :, None]                       # (B, T, 1)
    valid = jnp.asarray(valid_np)[:, :, None]                   # (B, T, 1)
    aligned = jnp.take_along_axis(x, idx, axis=1)               # on-device gather
    aligned = jnp.where(valid, aligned, 0.0)                    # pad_sequence zeros

    y = aligned + params['pe'][:T]                              # positional encoding 2
    mel_mask_f = jnp.asarray(mel_mask_np).astype(jnp.float32)[:, :, None]
    for bp in params['decoder']:
        y = fft_block(y, mel_mask_f, bp, nH)

    mel = final_linear(y, params['w_melT'], params['b_melT'])   # (B, n_mels, T)
    return {'mel_pred': mel, 'durations_pred': durations_pred}


# ----------------------------------------------------------------------------
# Main
# ----------------------------------------------------------------------------
if __name__ == "__main__":
    cfg = dict(
        n_phonemes=40, hidden_size=32, num_heads=2, kernel_size=3,
        filter_size=64, n_encoder_blocks=2, n_decoder_blocks=2, n_mels=16,
    )
    B, S = 2, 8

    key = jax.random.PRNGKey(0)
    k_params, k_tok = jax.random.split(key)
    params = init_model(k_params, cfg)

    tokens = jax.random.randint(k_tok, (B, S), 0, cfg['n_phonemes'], dtype=jnp.int32)
    mask_np = np.array([[True] * 8,
                        [True] * 6 + [False] * 2])

    out = fastspeech_forward(params, tokens, mask_np, cfg)
    jax.block_until_ready(out['mel_pred'])
    jax.block_until_ready(out['durations_pred'])

    assert out['mel_pred'].shape[0] == B and out['mel_pred'].shape[1] == cfg['n_mels']
    assert out['durations_pred'].shape == (B, S)
    assert np.all(np.isfinite(np.asarray(out['mel_pred'])))
    print("KERNEL_OK")
</pallas_src>

<mosaic_0001>
module attributes {stable_mosaic.version = 11 : i64} {
  func.func @fft_block_kernel(%arg0: i32, %arg1: memref<1x8x32xf32, #tpu.memory_space<vmem>>, %arg2: memref<1x8x1xf32, #tpu.memory_space<vmem>>, %arg3: memref<32x96xf32, #tpu.memory_space<vmem>>, %arg4: memref<1x96xf32, #tpu.memory_space<vmem>>, %arg5: memref<2x16x32xf32, #tpu.memory_space<vmem>>, %arg6: memref<1x32xf32, #tpu.memory_space<vmem>>, %arg7: memref<1x32xf32, #tpu.memory_space<vmem>>, %arg8: memref<1x32xf32, #tpu.memory_space<vmem>>, %arg9: memref<3x32x64xf32, #tpu.memory_space<vmem>>, %arg10: memref<1x64xf32, #tpu.memory_space<vmem>>, %arg11: memref<3x64x32xf32, #tpu.memory_space<vmem>>, %arg12: memref<1x32xf32, #tpu.memory_space<vmem>>, %arg13: memref<1x32xf32, #tpu.memory_space<vmem>>, %arg14: memref<1x32xf32, #tpu.memory_space<vmem>>, %arg15: memref<1x8x32xf32, #tpu.memory_space<vmem>>) attributes {dimension_semantics = [#tpu.dimension_semantics<parallel>], iteration_bounds = array<i64: 2>, scalar_prefetch = 0 : i64, scratch_operands = 0 : i64, tpu.core_type = #tpu.core_type<tc>, window_params = [{transform_indices = @transform_0, window_bounds = array<i64: 1, 8, 32>}, {transform_indices = @transform_1, window_bounds = array<i64: 1, 8, 1>}, {pipeline_mode = #tpu.pipeline_mode<synchronous>, transform_indices = @transform_2, window_bounds = array<i64: 32, 96>}, {pipeline_mode = #tpu.pipeline_mode<synchronous>, transform_indices = @transform_3, window_bounds = array<i64: 1, 96>}, {pipeline_mode = #tpu.pipeline_mode<synchronous>, transform_indices = @transform_4, window_bounds = array<i64: 2, 16, 32>}, {pipeline_mode = #tpu.pipeline_mode<synchronous>, transform_indices = @transform_5, window_bounds = array<i64: 1, 32>}, {pipeline_mode = #tpu.pipeline_mode<synchronous>, transform_indices = @transform_6, window_bounds = array<i64: 1, 32>}, {pipeline_mode = #tpu.pipeline_mode<synchronous>, transform_indices = @transform_7, window_bounds = array<i64: 1, 32>}, {pipeline_mode = #tpu.pipeline_mode<synchronous>, transform_indices = @transform_8, window_bounds = array<i64: 3, 32, 64>}, {pipeline_mode = #tpu.pipeline_mode<synchronous>, transform_indices = @transform_9, window_bounds = array<i64: 1, 64>}, {pipeline_mode = #tpu.pipeline_mode<synchronous>, transform_indices = @transform_10, window_bounds = array<i64: 3, 64, 32>}, {pipeline_mode = #tpu.pipeline_mode<synchronous>, transform_indices = @transform_11, window_bounds = array<i64: 1, 32>}, {pipeline_mode = #tpu.pipeline_mode<synchronous>, transform_indices = @transform_12, window_bounds = array<i64: 1, 32>}, {pipeline_mode = #tpu.pipeline_mode<synchronous>, transform_indices = @transform_13, window_bounds = array<i64: 1, 32>}, {transform_indices = @transform_14, window_bounds = array<i64: 1, 8, 32>}]} {
    %c0 = arith.constant 0 : index
    %c0_0 = arith.constant 0 : index
    %c0_1 = arith.constant 0 : index
    %0 = vector.load %arg1[%c0, %c0_0, %c0_1] : memref<1x8x32xf32, #tpu.memory_space<vmem>>, vector<1x8x32xf32>
    %1 = vector.shape_cast %0 : vector<1x8x32xf32> to vector<8x32xf32>
    %c0_2 = arith.constant 0 : index
    %c0_3 = arith.constant 0 : index
    %c0_4 = arith.constant 0 : index
    %2 = vector.load %arg2[%c0_2, %c0_3, %c0_4] : memref<1x8x1xf32, #tpu.memory_space<vmem>>, vector<1x8x1xf32>
    %3 = vector.shape_cast %2 : vector<1x8x1xf32> to vector<8x1xf32>
    %c0_5 = arith.constant 0 : index
    %c0_6 = arith.constant 0 : index
    %4 = vector.load %arg3[%c0_5, %c0_6] : memref<32x96xf32, #tpu.memory_space<vmem>>, vector<32x96xf32>
    %cst = arith.constant dense<0.000000e+00> : vector<8x96xf32>
    %5 = tpu.matmul %1, %4, %cst {dimension_numbers = #tpu.dot_dimension_numbers<[1], [0], [0], [1], [0, 0, 1, 1], [], []>} : vector<8x32xf32>, vector<32x96xf32>, vector<8x96xf32> -> vector<8x96xf32>
    %c0_7 = arith.constant 0 : index
    %c0_8 = arith.constant 0 : index
    %6 = vector.load %arg4[%c0_7, %c0_8] : memref<1x96xf32, #tpu.memory_space<vmem>>, vector<1x96xf32>
    %7 = vector.broadcast %6 : vector<1x96xf32> to vector<8x96xf32>
    %8 = arith.addf %5, %7 : vector<8x96xf32>
    %9 = vector.extract_strided_slice %8 {offsets = [0, 0], sizes = [8, 16], strides = [1, 1]} : vector<8x96xf32> to vector<8x16xf32>
    %10 = vector.extract_strided_slice %8 {offsets = [0, 32], sizes = [8, 16], strides = [1, 1]} : vector<8x96xf32> to vector<8x16xf32>
    %11 = vector.extract_strided_slice %8 {offsets = [0, 64], sizes = [8, 16], strides = [1, 1]} : vector<8x96xf32> to vector<8x16xf32>
    %cst_9 = arith.constant dense<0.000000e+00> : vector<8x8xf32>
    %12 = tpu.matmul %9, %10, %cst_9 {dimension_numbers = #tpu.dot_dimension_numbers<[1], [1], [0], [0], [0, 0, 1, 0], [], []>} : vector<8x16xf32>, vector<8x16xf32>, vector<8x8xf32> -> vector<8x8xf32>
    %cst_10 = arith.constant 0.176776692 : f32
    %13 = vector.broadcast %cst_10 : f32 to vector<8x8xf32>
    %14 = arith.mulf %12, %13 : vector<8x8xf32>
    %cst_11 = arith.constant 5.000000e-01 : f32
    %15 = vector.broadcast %cst_11 : f32 to vector<8x1xf32>
    %16 = arith.cmpf ogt, %3, %15 : vector<8x1xf32>
    %cst_12 = arith.constant -1.000000e+09 : f32
    %17 = vector.shape_cast %16 : vector<8x1xi1> to vector<8x1xi1>
    %18 = vector.broadcast %17 : vector<8x1xi1> to vector<8x8xi1>
    %19 = vector.broadcast %cst_12 : f32 to vector<8x8xf32>
    %20 = arith.select %18, %14, %19 : vector<8x8xi1>, vector<8x8xf32>
    %cst_13 = arith.constant dense<0xFF800000> : vector<8xf32>
    %21 = vector.multi_reduction <maximumf>, %20, %cst_13 [1] : vector<8x8xf32> to vector<8xf32>
    %22 = vector.shape_cast %21 : vector<8xf32> to vector<8x1xf32>
    %23 = vector.broadcast %22 : vector<8x1xf32> to vector<8x8xf32>
    %24 = arith.subf %20, %23 : vector<8x8xf32>
    %25 = math.exp %24 : vector<8x8xf32>
    %cst_14 = arith.constant dense<0.000000e+00> : vector<8xf32>
    %26 = vector.multi_reduction <add>, %25, %cst_14 [1] : vector<8x8xf32> to vector<8xf32>
    %27 = vector.shape_cast %26 : vector<8xf32> to vector<8x1xf32>
    %28 = tpu.reciprocal %27 {approx = true} : vector<8x1xf32> -> vector<8x1xf32>
    %29 = vector.broadcast %28 : vector<8x1xf32> to vector<8x8xf32>
    %30 = arith.mulf %25, %29 : vector<8x8xf32>
    %cst_15 = arith.constant dense<0.000000e+00> : vector<8x16xf32>
    %31 = tpu.matmul %30, %11, %cst_15 {dimension_numbers = #tpu.dot_dimension_numbers<[1], [0], [0], [1], [0, 0, 1, 1], [], []>} : vector<8x8xf32>, vector<8x16xf32>, vector<8x16xf32> -> vector<8x16xf32>
    %c0_16 = arith.constant 0 : index
    %c0_17 = arith.constant 0 : index
    %c0_18 = arith.constant 0 : index
    %32 = vector.load %arg5[%c0_16, %c0_17, %c0_18] : memref<2x16x32xf32, #tpu.memory_space<vmem>>, vector<1x16x32xf32>
    %33 = vector.shape_cast %32 : vector<1x16x32xf32> to vector<16x32xf32>
    %cst_19 = arith.constant dense<0.000000e+00> : vector<8x32xf32>
    %34 = tpu.matmul %31, %33, %cst_19 {dimension_numbers = #tpu.dot_dimension_numbers<[1], [0], [0], [1], [0, 0, 1, 1], [], []>} : vector<8x16xf32>, vector<16x32xf32>, vector<8x32xf32> -> vector<8x32xf32>
    %35 = vector.extract_strided_slice %8 {offsets = [0, 16], sizes = [8, 16], strides = [1, 1]} : vector<8x96xf32> to vector<8x16xf32>
    %36 = vector.extract_strided_slice %8 {offsets = [0, 48], sizes = [8, 16], strides = [1, 1]} : vector<8x96xf32> to vector<8x16xf32>
    %37 = vector.extract_strided_slice %8 {offsets = [0, 80], sizes = [8, 16], strides = [1, 1]} : vector<8x96xf32> to vector<8x16xf32>
    %cst_20 = arith.constant dense<0.000000e+00> : vector<8x8xf32>
    %38 = tpu.matmul %35, %36, %cst_20 {dimension_numbers = #tpu.dot_dimension_numbers<[1], [1], [0], [0], [0, 0, 1, 0], [], []>} : vector<8x16xf32>, vector<8x16xf32>, vector<8x8xf32> -> vector<8x8xf32>
    %cst_21 = arith.constant 0.176776692 : f32
    %39 = vector.broadcast %cst_21 : f32 to vector<8x8xf32>
    %40 = arith.mulf %38, %39 : vector<8x8xf32>
    %cst_22 = arith.constant 5.000000e-01 : f32
    %41 = vector.broadcast %cst_22 : f32 to vector<8x1xf32>
    %42 = arith.cmpf ogt, %3, %41 : vector<8x1xf32>
    %cst_23 = arith.constant -1.000000e+09 : f32
    %43 = vector.shape_cast %42 : vector<8x1xi1> to vector<8x1xi1>
    %44 = vector.broadcast %43 : vector<8x1xi1> to vector<8x8xi1>
    %45 = vector.broadcast %cst_23 : f32 to vector<8x8xf32>
    %46 = arith.select %44, %40, %45 : vector<8x8xi1>, vector<8x8xf32>
    %cst_24 = arith.constant dense<0xFF800000> : vector<8xf32>
    %47 = vector.multi_reduction <maximumf>, %46, %cst_24 [1] : vector<8x8xf32> to vector<8xf32>
    %48 = vector.shape_cast %47 : vector<8xf32> to vector<8x1xf32>
    %49 = vector.broadcast %48 : vector<8x1xf32> to vector<8x8xf32>
    %50 = arith.subf %46, %49 : vector<8x8xf32>
    %51 = math.exp %50 : vector<8x8xf32>
    %cst_25 = arith.constant dense<0.000000e+00> : vector<8xf32>
    %52 = vector.multi_reduction <add>, %51, %cst_25 [1] : vector<8x8xf32> to vector<8xf32>
    %53 = vector.shape_cast %52 : vector<8xf32> to vector<8x1xf32>
    %54 = tpu.reciprocal %53 {approx = true} : vector<8x1xf32> -> vector<8x1xf32>
    %55 = vector.broadcast %54 : vector<8x1xf32> to vector<8x8xf32>
    %56 = arith.mulf %51, %55 : vector<8x8xf32>
    %cst_26 = arith.constant dense<0.000000e+00> : vector<8x16xf32>
    %57 = tpu.matmul %56, %37, %cst_26 {dimension_numbers = #tpu.dot_dimension_numbers<[1], [0], [0], [1], [0, 0, 1, 1], [], []>} : vector<8x8xf32>, vector<8x16xf32>, vector<8x16xf32> -> vector<8x16xf32>
    %c1 = arith.constant 1 : index
    %c0_27 = arith.constant 0 : index
    %c0_28 = arith.constant 0 : index
    %58 = vector.load %arg5[%c1, %c0_27, %c0_28] : memref<2x16x32xf32, #tpu.memory_space<vmem>>, vector<1x16x32xf32>
    %59 = vector.shape_cast %58 : vector<1x16x32xf32> to vector<16x32xf32>
    %cst_29 = arith.constant dense<0.000000e+00> : vector<8x32xf32>
    %60 = tpu.matmul %57, %59, %cst_29 {dimension_numbers = #tpu.dot_dimension_numbers<[1], [0], [0], [1], [0, 0, 1, 1], [], []>} : vector<8x16xf32>, vector<16x32xf32>, vector<8x32xf32> -> vector<8x32xf32>
    %61 = arith.addf %34, %60 : vector<8x32xf32>
    %c0_30 = arith.constant 0 : index
    %c0_31 = arith.constant 0 : index
    %62 = vector.load %arg6[%c0_30, %c0_31] : memref<1x32xf32, #tpu.memory_space<vmem>>, vector<1x32xf32>
    %63 = vector.broadcast %62 : vector<1x32xf32> to vector<8x32xf32>
    %64 = arith.addf %61, %63 : vector<8x32xf32>
    %65 = arith.addf %64, %1 : vector<8x32xf32>
    %c0_32 = arith.constant 0 : index
    %c0_33 = arith.constant 0 : index
    %66 = vector.load %arg7[%c0_32, %c0_33] : memref<1x32xf32, #tpu.memory_space<vmem>>, vector<1x32xf32>
    %c0_34 = arith.constant 0 : index
    %c0_35 = arith.constant 0 : index
    %67 = vector.load %arg8[%c0_34, %c0_35] : memref<1x32xf32, #tpu.memory_space<vmem>>, vector<1x32xf32>
    %cst_36 = arith.constant dense<0.000000e+00> : vector<8xf32>
    %68 = vector.multi_reduction <add>, %65, %cst_36 [1] : vector<8x32xf32> to vector<8xf32>
    %69 = vector.shape_cast %68 : vector<8xf32> to vector<8x1xf32>
    %cst_37 = arith.constant 3.200000e+01 : f32
    %70 = vector.broadcast %cst_37 : f32 to vector<8x1xf32>
    %71 = arith.divf %69, %70 : vector<8x1xf32>
    %72 = vector.broadcast %71 : vector<8x1xf32> to vector<8x32xf32>
    %73 = arith.subf %65, %72 : vector<8x32xf32>
    %74 = arith.mulf %73, %73 : vector<8x32xf32>
    %cst_38 = arith.constant dense<0.000000e+00> : vector<8xf32>
    %75 = vector.multi_reduction <add>, %74, %cst_38 [1] : vector<8x32xf32> to vector<8xf32>
    %76 = vector.shape_cast %75 : vector<8xf32> to vector<8x1xf32>
    %cst_39 = arith.constant 3.200000e+01 : f32
    %77 = vector.broadcast %cst_39 : f32 to vector<8x1xf32>
    %78 = arith.divf %76, %77 : vector<8x1xf32>
    %79 = vector.broadcast %71 : vector<8x1xf32> to vector<8x32xf32>
    %80 = arith.subf %65, %79 : vector<8x32xf32>
    %cst_40 = arith.constant 9.99999974E-6 : f32
    %81 = vector.broadcast %cst_40 : f32 to vector<8x1xf32>
    %82 = arith.addf %78, %81 : vector<8x1xf32>
    %83 = math.rsqrt %82 : vector<8x1xf32>
    %84 = vector.broadcast %83 : vector<8x1xf32> to vector<8x32xf32>
    %85 = arith.mulf %80, %84 : vector<8x32xf32>
    %86 = vector.broadcast %66 : vector<1x32xf32> to vector<8x32xf32>
    %87 = arith.mulf %85, %86 : vector<8x32xf32>
    %88 = vector.broadcast %67 : vector<1x32xf32> to vector<8x32xf32>
    %89 = arith.addf %87, %88 : vector<8x32xf32>
    %c0_41 = arith.constant 0 : index
    %c0_42 = arith.constant 0 : index
    %90 = vector.load %arg10[%c0_41, %c0_42] : memref<1x64xf32, #tpu.memory_space<vmem>>, vector<1x64xf32>
    %cst_43 = arith.constant 0.000000e+00 : f32
    %91 = vector.broadcast %cst_43 : f32 to vector<1x32xf32>
    %92 = vector.extract_strided_slice %89 {offsets = [0, 0], sizes = [7, 32], strides = [1, 1]} : vector<8x32xf32> to vector<7x32xf32>
    %93 = tpu.concatenate %91, %92 in 0 : vector<1x32xf32>, vector<7x32xf32> -> vector<8x32xf32>
    %c0_44 = arith.constant 0 : index
    %c0_45 = arith.constant 0 : index
    %c0_46 = arith.constant 0 : index
    %94 = vector.load %arg9[%c0_44, %c0_45, %c0_46] : memref<3x32x64xf32, #tpu.memory_space<vmem>>, vector<1x32x64xf32>
    %95 = vector.shape_cast %94 : vector<1x32x64xf32> to vector<32x64xf32>
    %cst_47 = arith.constant dense<0.000000e+00> : vector<8x64xf32>
    %96 = tpu.matmul %93, %95, %cst_47 {dimension_numbers = #tpu.dot_dimension_numbers<[1], [0], [0], [1], [0, 0, 1, 1], [], []>} : vector<8x32xf32>, vector<32x64xf32>, vector<8x64xf32> -> vector<8x64xf32>
    %c1_48 = arith.constant 1 : index
    %c0_49 = arith.constant 0 : index
    %c0_50 = arith.constant 0 : index
    %97 = vector.load %arg9[%c1_48, %c0_49, %c0_50] : memref<3x32x64xf32, #tpu.memory_space<vmem>>, vector<1x32x64xf32>
    %98 = vector.shape_cast %97 : vector<1x32x64xf32> to vector<32x64xf32>
    %cst_51 = arith.constant dense<0.000000e+00> : vector<8x64xf32>
    %99 = tpu.matmul %89, %98, %cst_51 {dimension_numbers = #tpu.dot_dimension_numbers<[1], [0], [0], [1], [0, 0, 1, 1], [], []>} : vector<8x32xf32>, vector<32x64xf32>, vector<8x64xf32> -> vector<8x64xf32>
    %100 = arith.addf %96, %99 : vector<8x64xf32>
    %cst_52 = arith.constant 0.000000e+00 : f32
    %101 = vector.broadcast %cst_52 : f32 to vector<1x32xf32>
    %102 = vector.extract_strided_slice %89 {offsets = [1, 0], sizes = [7, 32], strides = [1, 1]} : vector<8x32xf32> to vector<7x32xf32>
    %103 = tpu.concatenate %102, %101 in 0 : vector<7x32xf32>, vector<1x32xf32> -> vector<8x32xf32>
    %c2 = arith.constant 2 : index
    %c0_53 = arith.constant 0 : index
    %c0_54 = arith.constant 0 : index
    %104 = vector.load %arg9[%c2, %c0_53, %c0_54] : memref<3x32x64xf32, #tpu.memory_space<vmem>>, vector<1x32x64xf32>
    %105 = vector.shape_cast %104 : vector<1x32x64xf32> to vector<32x64xf32>
    %cst_55 = arith.constant dense<0.000000e+00> : vector<8x64xf32>
    %106 = tpu.matmul %103, %105, %cst_55 {dimension_numbers = #tpu.dot_dimension_numbers<[1], [0], [0], [1], [0, 0, 1, 1], [], []>} : vector<8x32xf32>, vector<32x64xf32>, vector<8x64xf32> -> vector<8x64xf32>
    %107 = arith.addf %100, %106 : vector<8x64xf32>
    %108 = vector.broadcast %90 : vector<1x64xf32> to vector<8x64xf32>
    %109 = arith.addf %107, %108 : vector<8x64xf32>
    %cst_56 = arith.constant 0.000000e+00 : f32
    %110 = vector.broadcast %cst_56 : f32 to vector<8x64xf32>
    %111 = arith.maximumf %109, %110 : vector<8x64xf32>
    %c0_57 = arith.constant 0 : index
    %c0_58 = arith.constant 0 : index
    %112 = vector.load %arg12[%c0_57, %c0_58] : memref<1x32xf32, #tpu.memory_space<vmem>>, vector<1x32xf32>
    %cst_59 = arith.constant 0.000000e+00 : f32
    %113 = vector.broadcast %cst_59 : f32 to vector<1x64xf32>
    %114 = vector.extract_strided_slice %111 {offsets = [0, 0], sizes = [7, 64], strides = [1, 1]} : vector<8x64xf32> to vector<7x64xf32>
    %115 = tpu.concatenate %113, %114 in 0 : vector<1x64xf32>, vector<7x64xf32> -> vector<8x64xf32>
    %c0_60 = arith.constant 0 : index
    %c0_61 = arith.constant 0 : index
    %c0_62 = arith.constant 0 : index
    %116 = vector.load %arg11[%c0_60, %c0_61, %c0_62] : memref<3x64x32xf32, #tpu.memory_space<vmem>>, vector<1x64x32xf32>
    %117 = vector.shape_cast %116 : vector<1x64x32xf32> to vector<64x32xf32>
    %cst_63 = arith.constant dense<0.000000e+00> : vector<8x32xf32>
    %118 = tpu.matmul %115, %117, %cst_63 {dimension_numbers = #tpu.dot_dimension_numbers<[1], [0], [0], [1], [0, 0, 1, 1], [], []>} : vector<8x64xf32>, vector<64x32xf32>, vector<8x32xf32> -> vector<8x32xf32>
    %c1_64 = arith.constant 1 : index
    %c0_65 = arith.constant 0 : index
    %c0_66 = arith.constant 0 : index
    %119 = vector.load %arg11[%c1_64, %c0_65, %c0_66] : memref<3x64x32xf32, #tpu.memory_space<vmem>>, vector<1x64x32xf32>
    %120 = vector.shape_cast %119 : vector<1x64x32xf32> to vector<64x32xf32>
    %cst_67 = arith.constant dense<0.000000e+00> : vector<8x32xf32>
    %121 = tpu.matmul %111, %120, %cst_67 {dimension_numbers = #tpu.dot_dimension_numbers<[1], [0], [0], [1], [0, 0, 1, 1], [], []>} : vector<8x64xf32>, vector<64x32xf32>, vector<8x32xf32> -> vector<8x32xf32>
    %122 = arith.addf %118, %121 : vector<8x32xf32>
    %cst_68 = arith.constant 0.000000e+00 : f32
    %123 = vector.broadcast %cst_68 : f32 to vector<1x64xf32>
    %124 = vector.extract_strided_slice %111 {offsets = [1, 0], sizes = [7, 64], strides = [1, 1]} : vector<8x64xf32> to vector<7x64xf32>
    %125 = tpu.concatenate %124, %123 in 0 : vector<7x64xf32>, vector<1x64xf32> -> vector<8x64xf32>
    %c2_69 = arith.constant 2 : index
    %c0_70 = arith.constant 0 : index
    %c0_71 = arith.constant 0 : index
    %126 = vector.load %arg11[%c2_69, %c0_70, %c0_71] : memref<3x64x32xf32, #tpu.memory_space<vmem>>, vector<1x64x32xf32>
    %127 = vector.shape_cast %126 : vector<1x64x32xf32> to vector<64x32xf32>
    %cst_72 = arith.constant dense<0.000000e+00> : vector<8x32xf32>
    %128 = tpu.matmul %125, %127, %cst_72 {dimension_numbers = #tpu.dot_dimension_numbers<[1], [0], [0], [1], [0, 0, 1, 1], [], []>} : vector<8x64xf32>, vector<64x32xf32>, vector<8x32xf32> -> vector<8x32xf32>
    %129 = arith.addf %122, %128 : vector<8x32xf32>
    %130 = vector.broadcast %112 : vector<1x32xf32> to vector<8x32xf32>
    %131 = arith.addf %129, %130 : vector<8x32xf32>
    %132 = arith.addf %131, %89 : vector<8x32xf32>
    %c0_73 = arith.constant 0 : index
    %c0_74 = arith.constant 0 : index
    %133 = vector.load %arg13[%c0_73, %c0_74] : memref<1x32xf32, #tpu.memory_space<vmem>>, vector<1x32xf32>
    %c0_75 = arith.constant 0 : index
    %c0_76 = arith.constant 0 : index
    %134 = vector.load %arg14[%c0_75, %c0_76] : memref<1x32xf32, #tpu.memory_space<vmem>>, vector<1x32xf32>
    %cst_77 = arith.constant dense<0.000000e+00> : vector<8xf32>
    %135 = vector.multi_reduction <add>, %132, %cst_77 [1] : vector<8x32xf32> to vector<8xf32>
    %136 = vector.shape_cast %135 : vector<8xf32> to vector<8x1xf32>
    %cst_78 = arith.constant 3.200000e+01 : f32
    %137 = vector.broadcast %cst_78 : f32 to vector<8x1xf32>
    %138 = arith.divf %136, %137 : vector<8x1xf32>
    %139 = vector.broadcast %138 : vector<8x1xf32> to vector<8x32xf32>
    %140 = arith.subf %132, %139 : vector<8x32xf32>
    %141 = arith.mulf %140, %140 : vector<8x32xf32>
    %cst_79 = arith.constant dense<0.000000e+00> : vector<8xf32>
    %142 = vector.multi_reduction <add>, %141, %cst_79 [1] : vector<8x32xf32> to vector<8xf32>
    %143 = vector.shape_cast %142 : vector<8xf32> to vector<8x1xf32>
    %cst_80 = arith.constant 3.200000e+01 : f32
    %144 = vector.broadcast %cst_80 : f32 to vector<8x1xf32>
    %145 = arith.divf %143, %144 : vector<8x1xf32>
    %146 = vector.broadcast %138 : vector<8x1xf32> to vector<8x32xf32>
    %147 = arith.subf %132, %146 : vector<8x32xf32>
    %cst_81 = arith.constant 9.99999974E-6 : f32
    %148 = vector.broadcast %cst_81 : f32 to vector<8x1xf32>
    %149 = arith.addf %145, %148 : vector<8x1xf32>
    %150 = math.rsqrt %149 : vector<8x1xf32>
    %151 = vector.broadcast %150 : vector<8x1xf32> to vector<8x32xf32>
    %152 = arith.mulf %147, %151 : vector<8x32xf32>
    %153 = vector.broadcast %133 : vector<1x32xf32> to vector<8x32xf32>
    %154 = arith.mulf %152, %153 : vector<8x32xf32>
    %155 = vector.broadcast %134 : vector<1x32xf32> to vector<8x32xf32>
    %156 = arith.addf %154, %155 : vector<8x32xf32>
    %c0_82 = arith.constant 0 : index
    %c0_83 = arith.constant 0 : index
    %c0_84 = arith.constant 0 : index
    %157 = vector.load %arg15[%c0_82, %c0_83, %c0_84] : memref<1x8x32xf32, #tpu.memory_space<vmem>>, vector<1x8x32xf32>
    %158 = vector.shape_cast %157 : vector<1x8x32xf32> to vector<8x32xf32>
    %159 = vector.shape_cast %156 : vector<8x32xf32> to vector<1x8x32xf32>
    tpu.vector_store %arg15[%c0_82, %c0_83, %c0_84], %159 {strides = array<i32>} : memref<1x8x32xf32, #tpu.memory_space<vmem>>, vector<1x8x32xf32>,
    return
  }
  func.func @transform_0(%arg0: i32) -> (i32, i32, i32) {
    %c0_i32 = arith.constant 0 : i32
    %c0_i32_0 = arith.constant 0 : i32
    %c0_i32_1 = arith.constant 0 : i32
    return %arg0, %c0_i32, %c0_i32_0 : i32, i32, i32
  }
  func.func @transform_1(%arg0: i32) -> (i32, i32, i32) {
    %c0_i32 = arith.constant 0 : i32
    %c0_i32_0 = arith.constant 0 : i32
    %c0_i32_1 = arith.constant 0 : i32
    return %arg0, %c0_i32, %c0_i32_0 : i32, i32, i32
  }
  func.func @transform_2(%arg0: i32) -> (i32, i32) {
    %c0_i32 = arith.constant 0 : i32
    %c0_i32_0 = arith.constant 0 : i32
    %c0_i32_1 = arith.constant 0 : i32
    return %c0_i32, %c0_i32_0 : i32, i32
  }
  func.func @transform_3(%arg0: i32) -> (i32, i32) {
    %c0_i32 = arith.constant 0 : i32
    %c0_i32_0 = arith.constant 0 : i32
    %c0_i32_1 = arith.constant 0 : i32
    return %c0_i32, %c0_i32_0 : i32, i32
  }
  func.func @transform_4(%arg0: i32) -> (i32, i32, i32) {
    %c0_i32 = arith.constant 0 : i32
    %c0_i32_0 = arith.constant 0 : i32
    %c0_i32_1 = arith.constant 0 : i32
    %c0_i32_2 = arith.constant 0 : i32
    return %c0_i32, %c0_i32_0, %c0_i32_1 : i32, i32, i32
  }
  func.func @transform_5(%arg0: i32) -> (i32, i32) {
    %c0_i32 = arith.constant 0 : i32
    %c0_i32_0 = arith.constant 0 : i32
    %c0_i32_1 = arith.constant 0 : i32
    return %c0_i32, %c0_i32_0 : i32, i32
  }
  func.func @transform_6(%arg0: i32) -> (i32, i32) {
    %c0_i32 = arith.constant 0 : i32
    %c0_i32_0 = arith.constant 0 : i32
    %c0_i32_1 = arith.constant 0 : i32
    return %c0_i32, %c0_i32_0 : i32, i32
  }
  func.func @transform_7(%arg0: i32) -> (i32, i32) {
    %c0_i32 = arith.constant 0 : i32
    %c0_i32_0 = arith.constant 0 : i32
    %c0_i32_1 = arith.constant 0 : i32
    return %c0_i32, %c0_i32_0 : i32, i32
  }
  func.func @transform_8(%arg0: i32) -> (i32, i32, i32) {
    %c0_i32 = arith.constant 0 : i32
    %c0_i32_0 = arith.constant 0 : i32
    %c0_i32_1 = arith.constant 0 : i32
    %c0_i32_2 = arith.constant 0 : i32
    return %c0_i32, %c0_i32_0, %c0_i32_1 : i32, i32, i32
  }
  func.func @transform_9(%arg0: i32) -> (i32, i32) {
    %c0_i32 = arith.constant 0 : i32
    %c0_i32_0 = arith.constant 0 : i32
    %c0_i32_1 = arith.constant 0 : i32
    return %c0_i32, %c0_i32_0 : i32, i32
  }
  func.func @transform_10(%arg0: i32) -> (i32, i32, i32) {
    %c0_i32 = arith.constant 0 : i32
    %c0_i32_0 = arith.constant 0 : i32
    %c0_i32_1 = arith.constant 0 : i32
    %c0_i32_2 = arith.constant 0 : i32
    return %c0_i32, %c0_i32_0, %c0_i32_1 : i32, i32, i32
  }
  func.func @transform_11(%arg0: i32) -> (i32, i32) {
    %c0_i32 = arith.constant 0 : i32
    %c0_i32_0 = arith.constant 0 : i32
    %c0_i32_1 = arith.constant 0 : i32
    return %c0_i32, %c0_i32_0 : i32, i32
  }
  func.func @transform_12(%arg0: i32) -> (i32, i32) {
    %c0_i32 = arith.constant 0 : i32
    %c0_i32_0 = arith.constant 0 : i32
    %c0_i32_1 = arith.constant 0 : i32
    return %c0_i32, %c0_i32_0 : i32, i32
  }
  func.func @transform_13(%arg0: i32) -> (i32, i32) {
    %c0_i32 = arith.constant 0 : i32
    %c0_i32_0 = arith.constant 0 : i32
    %c0_i32_1 = arith.constant 0 : i32
    return %c0_i32, %c0_i32_0 : i32, i32
  }
  func.func @transform_14(%arg0: i32) -> (i32, i32, i32) {
    %c0_i32 = arith.constant 0 : i32
    %c0_i32_0 = arith.constant 0 : i32
    %c0_i32_1 = arith.constant 0 : i32
    return %arg0, %c0_i32, %c0_i32_0 : i32, i32, i32
  }
}

</mosaic_0001>

<llo_original>
// kernel: tpu_custom_call.1
$region0: #{tpu_custom_call.1}
  #allocation0 [shape = 'u32[]', space=smem, size = 0x4, offset = 0x4, fixed_abs, tag = 'smem constant byte address 0x4 - core index']
  #allocation1 [shape = 'u32[72,128]{1,0:T(1,128)}', space=vmem, size = 0x9000, scoped, tag = 'internal scratch']
  %s0 = inlined_call_operand.vmem [shape: f32[2,8,32], index: 0, kind: input, shape index: {}]
  %s1 = inlined_call_operand.vmem [shape: f32[2,8,1], index: 1, kind: input, shape index: {}]
  %s2 = inlined_call_operand.vmem [shape: f32[32,96], index: 2, kind: input, shape index: {}]
  %s3 = inlined_call_operand.vmem [shape: f32[1,96], index: 3, kind: input, shape index: {}]
  %s4 = inlined_call_operand.vmem [shape: f32[2,16,32], index: 4, kind: input, shape index: {}]
  %s5 = inlined_call_operand.vmem [shape: f32[1,32], index: 5, kind: input, shape index: {}]
  %s6 = inlined_call_operand.vmem [shape: f32[1,32], index: 6, kind: input, shape index: {}]
  %s7 = inlined_call_operand.vmem [shape: f32[1,32], index: 7, kind: input, shape index: {}]
  %s8 = inlined_call_operand.vmem [shape: f32[3,32,64], index: 8, kind: input, shape index: {}]
  %s9 = inlined_call_operand.vmem [shape: f32[1,64], index: 9, kind: input, shape index: {}]
  %s10 = inlined_call_operand.vmem [shape: f32[3,64,32], index: 10, kind: input, shape index: {}]
  %s11 = inlined_call_operand.vmem [shape: f32[1,32], index: 11, kind: input, shape index: {}]
  %s12 = inlined_call_operand.vmem [shape: f32[1,32], index: 12, kind: input, shape index: {}]
  %s13 = inlined_call_operand.vmem [shape: f32[1,32], index: 13, kind: input, shape index: {}]
  %s14 = inlined_call_operand.hbm [shape: f32[2,8,32], index: 14, kind: output, shape index: {}]
  %s15 = sld [smem:[#allocation0]]
  $region89: #{tpu_custom_call.1} parent=0
    _
  %s17 = ssub.s32 1, %s15
  %s18 = scalar_select 0, %s17, %s15
  $region1: #{tpu_custom_call.1} parent=0
    #allocation2 [shape = 'u8[8192]{0}', space=vmem, size = 0x2000, scoped, tag = 'output window, operand 0']
    #allocation3 [shape = 's32[2]{0}', space=sflag, size = 0x8, scoped, tag = 'scoped memory for tpu_custom_call.1']
    %19 = vsyncpa [#allocation3], 0
    %s20 = scalar_lea.sflag [#allocation3], 1
    %21 = vsyncpa %s20, 0
    loop: start=0, step=1, limit=4
    $region2: #{tpu_custom_call.1} parent=1 // loop_pre_header
      _
    $region3: #{tpu_custom_call.1} parent=1 // loop_header
      %s23 = sphi 0, %s27
      %p24 = scmp.ge.s32.totalorder %s23, 4
      %s33 = sphi 0, %s35
      %s36 = sphi 0, %s33
      %s37 = sphi 0, %s36
      %s53 = sphi 0, %s37
      %s59 = sphi 0, %s61
      %s62 = sphi 0, %s59
      %s63 = sphi 0, %s62
      %s79 = sphi 0, %s63
      %s83 = sphi 0, %s83
      %s85 = sphi 0, %s83
      %s86 = sphi 0, %s85
      %s100 = sphi 0, %s86
      %s104 = sphi 0, %s104
      %s106 = sphi 0, %s104
      %s107 = sphi 0, %s106
      %s121 = sphi 0, %s107
      %s125 = sphi 0, %s125
      %s127 = sphi 0, %s125
      %s128 = sphi 0, %s127
      %s142 = sphi 0, %s128
      %s146 = sphi 0, %s146
      %s148 = sphi 0, %s146
      %s149 = sphi 0, %s148
      %s163 = sphi 0, %s149
      %s167 = sphi 0, %s167
      %s169 = sphi 0, %s167
      %s170 = sphi 0, %s169
      %s184 = sphi 0, %s170
      %s188 = sphi 0, %s188
      %s190 = sphi 0, %s188
      %s191 = sphi 0, %s190
      %s205 = sphi 0, %s191
      %s209 = sphi 0, %s209
      %s211 = sphi 0, %s209
      %s212 = sphi 0, %s211
      %s226 = sphi 0, %s212
      %s230 = sphi 0, %s230
      %s232 = sphi 0, %s230
      %s233 = sphi 0, %s232
      %s247 = sphi 0, %s233
      %s251 = sphi 0, %s251
      %s253 = sphi 0, %s251
      %s254 = sphi 0, %s253
      %s268 = sphi 0, %s254
      %s272 = sphi 0, %s272
      %s274 = sphi 0, %s272
      %s275 = sphi 0, %s274
      %s289 = sphi 0, %s275
      %s293 = sphi 0, %s293
      %s295 = sphi 0, %s293
      %s296 = sphi 0, %s295
      %s310 = sphi 0, %s296
      %s314 = sphi 0, %s314
      %s316 = sphi 0, %s314
      %s317 = sphi 0, %s316
      %s331 = sphi 0, %s317
      %s337 = sphi 0, %s339
      %s340 = sphi 0, %s337
      %s341 = sphi 0, %s340
      %s357 = sphi 0, %s341
    $region4: #{tpu_custom_call.1} parent=1 // loop_header_branch
      %26 = sbr.rel (%p24) target = $region8
    $region5: #{tpu_custom_call.1} parent=1 // loop_body
      %s28 = ssub.s32 %s23, 1
      %s29 = ssub.s32 %s23, 2
      %s30 = sadd.s32 %s23, 1
      %s31 = ssub.s32 %s23, %s30
      %p32 = scmp.eq.s32.totalorder %s31, 0
      %s34 = sadd.s32 %s33, 1
      %s35 = scalar_select %p32, %s33, %s34
      %p38 = pneg %p32
      %p39 = scmp.eq.s32.totalorder %s23, 1
      %p40 = por %p38, %p39
      %p41 = scmp.ne.s32.totalorder %s33, %s36
      %p42 = scmp.eq.s32.totalorder %s23, 0
      %p43 = por %p41, %p42
      %p44 = scmp.ne.s32.totalorder %s33, %s36
      %p45 = scmp.eq.s32.totalorder %s28, 1
      %p46 = por %p44, %p45
      %p47 = scmp.ne.s32.totalorder %s36, %s37
      %p48 = scmp.eq.s32.totalorder %s28, 0
      %p49 = por %p47, %p48
      %p50 = scmp.ne.s32.totalorder %s36, %s37
      %p51 = scmp.eq.s32.totalorder %s29, 1
      %p52 = por %p50, %p51
      %p54 = scmp.ne.s32.totalorder %s37, %s53
      %p55 = scmp.eq.s32.totalorder %s29, 0
      %p56 = por %p54, %p55
      %s57 = ssub.s32 %s23, %s30
      %p58 = scmp.eq.s32.totalorder %s57, 0
      %s60 = sadd.s32 %s59, 1
      %s61 = scalar_select %p58, %s59, %s60
      %p64 = pneg %p58
      %p65 = scmp.eq.s32.totalorder %s23, 1
      %p66 = por %p64, %p65
      %p67 = scmp.ne.s32.totalorder %s59, %s62
      %p68 = scmp.eq.s32.totalorder %s23, 0
      %p69 = por %p67, %p68
      %p70 = scmp.ne.s32.totalorder %s59, %s62
      %p71 = scmp.eq.s32.totalorder %s28, 1
      %p72 = por %p70, %p71
      %p73 = scmp.ne.s32.totalorder %s62, %s63
      %p74 = scmp.eq.s32.totalorder %s28, 0
      %p75 = por %p73, %p74
      %p76 = scmp.ne.s32.totalorder %s62, %s63
      %p77 = scmp.eq.s32.totalorder %s29, 1
      %p78 = por %p76, %p77
      %p80 = scmp.ne.s32.totalorder %s63, %s79
      %p81 = scmp.eq.s32.totalorder %s29, 0
      %p82 = por %p80, %p81
      %s84 = sadd.s32 %s83, 1
      %p87 = scmp.eq.s32.totalorder %s23, 1
      %p88 = scmp.ne.s32.totalorder %s83, %s85
      %p89 = scmp.eq.s32.totalorder %s23, 0
      %p90 = por %p88, %p89
      %p91 = scmp.ne.s32.totalorder %s83, %s85
      %p92 = scmp.eq.s32.totalorder %s28, 1
      %p93 = por %p91, %p92
      %p94 = scmp.ne.s32.totalorder %s85, %s86
      %p95 = scmp.eq.s32.totalorder %s28, 0
      %p96 = por %p94, %p95
      %p97 = scmp.ne.s32.totalorder %s85, %s86
      %p98 = scmp.eq.s32.totalorder %s29, 1
      %p99 = por %p97, %p98
      %p101 = scmp.ne.s32.totalorder %s86, %s100
      %p102 = scmp.eq.s32.totalorder %s29, 0
      %p103 = por %p101, %p102
      %s105 = sadd.s32 %s104, 1
      %p108 = scmp.eq.s32.totalorder %s23, 1
      %p109 = scmp.ne.s32.totalorder %s104, %s106
      %p110 = scmp.eq.s32.totalorder %s23, 0
      %p111 = por %p109, %p110
      %p112 = scmp.ne.s32.totalorder %s104, %s106
      %p113 = scmp.eq.s32.totalorder %s28, 1
      %p114 = por %p112, %p113
      %p115 = scmp.ne.s32.totalorder %s106, %s107
      %p116 = scmp.eq.s32.totalorder %s28, 0
      %p117 = por %p115, %p116
      %p118 = scmp.ne.s32.totalorder %s106, %s107
      %p119 = scmp.eq.s32.totalorder %s29, 1
      %p120 = por %p118, %p119
      %p122 = scmp.ne.s32.totalorder %s107, %s121
      %p123 = scmp.eq.s32.totalorder %s29, 0
      %p124 = por %p122, %p123
      %s126 = sadd.s32 %s125, 1
      %p129 = scmp.eq.s32.totalorder %s23, 1
      %p130 = scmp.ne.s32.totalorder %s125, %s127
      %p131 = scmp.eq.s32.totalorder %s23, 0
      %p132 = por %p130, %p131
      %p133 = scmp.ne.s32.totalorder %s125, %s127
      %p134 = scmp.eq.s32.totalorder %s28, 1
      %p135 = por %p133, %p134
      %p136 = scmp.ne.s32.totalorder %s127, %s128
      %p137 = scmp.eq.s32.totalorder %s28, 0
      %p138 = por %p136, %p137
      %p139 = scmp.ne.s32.totalorder %s127, %s128
      %p140 = scmp.eq.s32.totalorder %s29, 1
      %p141 = por %p139, %p140
      %p143 = scmp.ne.s32.totalorder %s128, %s142
      %p144 = scmp.eq.s32.totalorder %s29, 0
      %p145 = por %p143, %p144
      %s147 = sadd.s32 %s146, 1
      %p150 = scmp.eq.s32.totalorder %s23, 1
      %p151 = scmp.ne.s32.totalorder %s146, %s148
      %p152 = scmp.eq.s32.totalorder %s23, 0
      %p153 = por %p151, %p152
      %p154 = scmp.ne.s32.totalorder %s146, %s148
      %p155 = scmp.eq.s32.totalorder %s28, 1
      %p156 = por %p154, %p155
      %p157 = scmp.ne.s32.totalorder %s148, %s149
      %p158 = scmp.eq.s32.totalorder %s28, 0
      %p159 = por %p157, %p158
      %p160 = scmp.ne.s32.totalorder %s148, %s149
      %p161 = scmp.eq.s32.totalorder %s29, 1
      %p162 = por %p160, %p161
      %p164 = scmp.ne.s32.totalorder %s149, %s163
      %p165 = scmp.eq.s32.totalorder %s29, 0
      %p166 = por %p164, %p165
      %s168 = sadd.s32 %s167, 1
      %p171 = scmp.eq.s32.totalorder %s23, 1
      %p172 = scmp.ne.s32.totalorder %s167, %s169
      %p173 = scmp.eq.s32.totalorder %s23, 0
      %p174 = por %p172, %p173
      %p175 = scmp.ne.s32.totalorder %s167, %s169
      %p176 = scmp.eq.s32.totalorder %s28, 1
      %p177 = por %p175, %p176
      %p178 = scmp.ne.s32.totalorder %s169, %s170
      %p179 = scmp.eq.s32.totalorder %s28, 0
      %p180 = por %p178, %p179
      %p181 = scmp.ne.s32.totalorder %s169, %s170
      %p182 = scmp.eq.s32.totalorder %s29, 1
      %p183 = por %p181, %p182
      %p185 = scmp.ne.s32.totalorder %s170, %s184
      %p186 = scmp.eq.s32.totalorder %s29, 0
      %p187 = por %p185, %p186
      %s189 = sadd.s32 %s188, 1
      %p192 = scmp.eq.s32.totalorder %s23, 1
      %p193 = scmp.ne.s32.totalorder %s188, %s190
      %p194 = scmp.eq.s32.totalorder %s23, 0
      %p195 = por %p193, %p194
      %p196 = scmp.ne.s32.totalorder %s188, %s190
      %p197 = scmp.eq.s32.totalorder %s28, 1
      %p198 = por %p196, %p197
      %p199 = scmp.ne.s32.totalorder %s190, %s191
      %p200 = scmp.eq.s32.totalorder %s28, 0
      %p201 = por %p199, %p200
      %p202 = scmp.ne.s32.totalorder %s190, %s191
      %p203 = scmp.eq.s32.totalorder %s29, 1
      %p204 = por %p202, %p203
      %p206 = scmp.ne.s32.totalorder %s191, %s205
      %p207 = scmp.eq.s32.totalorder %s29, 0
      %p208 = por %p206, %p207
      %s210 = sadd.s32 %s209, 1
      %p213 = scmp.eq.s32.totalorder %s23, 1
      %p214 = scmp.ne.s32.totalorder %s209, %s211
      %p215 = scmp.eq.s32.totalorder %s23, 0
      %p216 = por %p214, %p215
      %p217 = scmp.ne.s32.totalorder %s209, %s211
      %p218 = scmp.eq.s32.totalorder %s28, 1
      %p219 = por %p217, %p218
      %p220 = scmp.ne.s32.totalorder %s211, %s212
      %p221 = scmp.eq.s32.totalorder %s28, 0
      %p222 = por %p220, %p221
      %p223 = scmp.ne.s32.totalorder %s211, %s212
      %p224 = scmp.eq.s32.totalorder %s29, 1
      %p225 = por %p223, %p224
      %p227 = scmp.ne.s32.totalorder %s212, %s226
      %p228 = scmp.eq.s32.totalorder %s29, 0
      %p229 = por %p227, %p228
      %s231 = sadd.s32 %s230, 1
      %p234 = scmp.eq.s32.totalorder %s23, 1
      %p235 = scmp.ne.s32.totalorder %s230, %s232
      %p236 = scmp.eq.s32.totalorder %s23, 0
      %p237 = por %p235, %p236
      %p238 = scmp.ne.s32.totalorder %s230, %s232
      %p239 = scmp.eq.s32.totalorder %s28, 1
      %p240 = por %p238, %p239
      %p241 = scmp.ne.s32.totalorder %s232, %s233
      %p242 = scmp.eq.s32.totalorder %s28, 0
      %p243 = por %p241, %p242
      %p244 = scmp.ne.s32.totalorder %s232, %s233
      %p245 = scmp.eq.s32.totalorder %s29, 1
      %p246 = por %p244, %p245
      %p248 = scmp.ne.s32.totalorder %s233, %s247
      %p249 = scmp.eq.s32.totalorder %s29, 0
      %p250 = por %p248, %p249
      %s252 = sadd.s32 %s251, 1
      %p255 = scmp.eq.s32.totalorder %s23, 1
      %p256 = scmp.ne.s32.totalorder %s251, %s253
      %p257 = scmp.eq.s32.totalorder %s23, 0
      %p258 = por %p256, %p257
      %p259 = scmp.ne.s32.totalorder %s251, %s253
      %p260 = scmp.eq.s32.totalorder %s28, 1
      %p261 = por %p259, %p260
      %p262 = scmp.ne.s32.totalorder %s253, %s254
      %p263 = scmp.eq.s32.totalorder %s28, 0
      %p264 = por %p262, %p263
      %p265 = scmp.ne.s32.totalorder %s253, %s254
      %p266 = scmp.eq.s32.totalorder %s29, 1
      %p267 = por %p265, %p266
      %p269 = scmp.ne.s32.totalorder %s254, %s268
      %p270 = scmp.eq.s32.totalorder %s29, 0
      %p271 = por %p269, %p270
      %s273 = sadd.s32 %s272, 1
      %p276 = scmp.eq.s32.totalorder %s23, 1
      %p277 = scmp.ne.s32.totalorder %s272, %s274
      %p278 = scmp.eq.s32.totalorder %s23, 0
      %p279 = por %p277, %p278
      %p280 = scmp.ne.s32.totalorder %s272, %s274
      %p281 = scmp.eq.s32.totalorder %s28, 1
      %p282 = por %p280, %p281
      %p283 = scmp.ne.s32.totalorder %s274, %s275
      %p284 = scmp.eq.s32.totalorder %s28, 0
      %p285 = por %p283, %p284
      %p286 = scmp.ne.s32.totalorder %s274, %s275
      %p287 = scmp.eq.s32.totalorder %s29, 1
      %p288 = por %p286, %p287
      %p290 = scmp.ne.s32.totalorder %s275, %s289
      %p291 = scmp.eq.s32.totalorder %s29, 0
      %p292 = por %p290, %p291
      %s294 = sadd.s32 %s293, 1
      %p297 = scmp.eq.s32.totalorder %s23, 1
      %p298 = scmp.ne.s32.totalorder %s293, %s295
      %p299 = scmp.eq.s32.totalorder %s23, 0
      %p300 = por %p298, %p299
      %p301 = scmp.ne.s32.totalorder %s293, %s295
      %p302 = scmp.eq.s32.totalorder %s28, 1
      %p303 = por %p301, %p302
      %p304 = scmp.ne.s32.totalorder %s295, %s296
      %p305 = scmp.eq.s32.totalorder %s28, 0
      %p306 = por %p304, %p305
      %p307 = scmp.ne.s32.totalorder %s295, %s296
      %p308 = scmp.eq.s32.totalorder %s29, 1
      %p309 = por %p307, %p308
      %p311 = scmp.ne.s32.totalorder %s296, %s310
      %p312 = scmp.eq.s32.totalorder %s29, 0
      %p313 = por %p311, %p312
      %s315 = sadd.s32 %s314, 1
      %p318 = scmp.eq.s32.totalorder %s23, 1
      %p319 = scmp.ne.s32.totalorder %s314, %s316
      %p320 = scmp.eq.s32.totalorder %s23, 0
      %p321 = por %p319, %p320
      %p322 = scmp.ne.s32.totalorder %s314, %s316
      %p323 = scmp.eq.s32.totalorder %s28, 1
      %p324 = por %p322, %p323
      %p325 = scmp.ne.s32.totalorder %s316, %s317
      %p326 = scmp.eq.s32.totalorder %s28, 0
      %p327 = por %p325, %p326
      %p328 = scmp.ne.s32.totalorder %s316, %s317
      %p329 = scmp.eq.s32.totalorder %s29, 1
      %p330 = por %p328, %p329
      %p332 = scmp.ne.s32.totalorder %s317, %s331
      %p333 = scmp.eq.s32.totalorder %s29, 0
      %p334 = por %p332, %p333
      %s335 = ssub.s32 %s23, %s30
      %p336 = scmp.eq.s32.totalorder %s335, 0
      %s338 = sadd.s32 %s337, 1
      %s339 = scalar_select %p336, %s337, %s338
      %p342 = pneg %p336
      %p343 = scmp.eq.s32.totalorder %s23, 1
      %p344 = por %p342, %p343
      %p345 = scmp.ne.s32.totalorder %s337, %s340
      %p346 = scmp.eq.s32.totalorder %s23, 0
      %p347 = por %p345, %p346
      %p348 = scmp.ne.s32.totalorder %s337, %s340
      %p349 = scmp.eq.s32.totalorder %s28, 1
      %p350 = por %p348, %p349
      %p351 = scmp.ne.s32.totalorder %s340, %s341
      %p352 = scmp.eq.s32.totalorder %s28, 0
      %p353 = por %p351, %p352
      %p354 = scmp.ne.s32.totalorder %s340, %s341
      %p355 = scmp.eq.s32.totalorder %s29, 1
      %p356 = por %p354, %p355
      %p358 = scmp.ne.s32.totalorder %s341, %s357
      %p359 = scmp.eq.s32.totalorder %s29, 0
      %p360 = por %p358, %p359
      %p361 = scmp.le.s32.totalorder 1, %s23
      %p362 = scmp.lt.s32.totalorder %s23, 3
      %p363 = pnand %p361, %p362
      %p364 = pneg %p363
      // Predicated region
      $region9: #{tpu_custom_call.1} parent=5 // pred_check
        _
      $region10: #{tpu_custom_call.1} parent=5 // pred_check_branch
        %366 = sbr.rel (%p363) target = $region12
      $region11: #{tpu_custom_call.1} parent=5 // pred_region
        %s367 = ssub.s32 %s23, 1
        // Predicated region
        $region13: #{tpu_custom_call.1} parent=11 // pred_check
          %p368 = pneg %p96
        $region14: #{tpu_custom_call.1} parent=11 // pred_check_branch
          %370 = sbr.rel (%p368) target = $region16
        $region15: #{tpu_custom_call.1} parent=11 // pred_region
          _
        $region16: #{tpu_custom_call.1} parent=11 // pred_fallthru
          _
        // Predicated region
        $region17: #{tpu_custom_call.1} parent=11 // pred_check
          %p371 = pneg %p117
        $region18: #{tpu_custom_call.1} parent=11 // pred_check_branch
          %373 = sbr.rel (%p371) target = $region20
        $region19: #{tpu_custom_call.1} parent=11 // pred_region
          _
        $region20: #{tpu_custom_call.1} parent=11 // pred_fallthru
          _
        // Predicated region
        $region21: #{tpu_custom_call.1} parent=11 // pred_check
          %p374 = pneg %p138
        $region22: #{tpu_custom_call.1} parent=11 // pred_check_branch
          %376 = sbr.rel (%p374) target = $region24
        $region23: #{tpu_custom_call.1} parent=11 // pred_region
          _
        $region24: #{tpu_custom_call.1} parent=11 // pred_fallthru
          _
        // Predicated region
        $region25: #{tpu_custom_call.1} parent=11 // pred_check
          %p377 = pneg %p159
        $region26: #{tpu_custom_call.1} parent=11 // pred_check_branch
          %379 = sbr.rel (%p377) target = $region28
        $region27: #{tpu_custom_call.1} parent=11 // pred_region
          _
        $region28: #{tpu_custom_call.1} parent=11 // pred_fallthru
          _
        // Predicated region
        $region29: #{tpu_custom_call.1} parent=11 // pred_check
          %p380 = pneg %p180
        $region30: #{tpu_custom_call.1} parent=11 // pred_check_branch
          %382 = sbr.rel (%p380) target = $region32
        $region31: #{tpu_custom_call.1} parent=11 // pred_region
          _
        $region32: #{tpu_custom_call.1} parent=11 // pred_fallthru
          _
        // Predicated region
        $region33: #{tpu_custom_call.1} parent=11 // pred_check
          %p383 = pneg %p201
        $region34: #{tpu_custom_call.1} parent=11 // pred_check_branch
          %385 = sbr.rel (%p383) target = $region36
        $region35: #{tpu_custom_call.1} parent=11 // pred_region
          _
        $region36: #{tpu_custom_call.1} parent=11 // pred_fallthru
          _
        // Predicated region
        $region37: #{tpu_custom_call.1} parent=11 // pred_check
          %p386 = pneg %p222
        $region38: #{tpu_custom_call.1} parent=11 // pred_check_branch
          %388 = sbr.rel (%p386) target = $region40
        $region39: #{tpu_custom_call.1} parent=11 // pred_region
          _
        $region40: #{tpu_custom_call.1} parent=11 // pred_fallthru
          _
        // Predicated region
        $region41: #{tpu_custom_call.1} parent=11 // pred_check
          %p389 = pneg %p243
        $region42: #{tpu_custom_call.1} parent=11 // pred_check_branch
          %391 = sbr.rel (%p389) target = $region44
        $region43: #{tpu_custom_call.1} parent=11 // pred_region
          _
        $region44: #{tpu_custom_call.1} parent=11 // pred_fallthru
          _
        // Predicated region
        $region45: #{tpu_custom_call.1} parent=11 // pred_check
          %p392 = pneg %p264
        $region46: #{tpu_custom_call.1} parent=11 // pred_check_branch
          %394 = sbr.rel (%p392) target = $region48
        $region47: #{tpu_custom_call.1} parent=11 // pred_region
          _
        $region48: #{tpu_custom_call.1} parent=11 // pred_fallthru
          _
        // Predicated region
        $region49: #{tpu_custom_call.1} parent=11 // pred_check
          %p395 = pneg %p285
        $region50: #{tpu_custom_call.1} parent=11 // pred_check_branch
          %397 = sbr.rel (%p395) target = $region52
        $region51: #{tpu_custom_call.1} parent=11 // pred_region
          _
        $region52: #{tpu_custom_call.1} parent=11 // pred_fallthru
          _
        // Predicated region
        $region53: #{tpu_custom_call.1} parent=11 // pred_check
          %p398 = pneg %p306
        $region54: #{tpu_custom_call.1} parent=11 // pred_check_branch
          %400 = sbr.rel (%p398) target = $region56
        $region55: #{tpu_custom_call.1} parent=11 // pred_region
          _
        $region56: #{tpu_custom_call.1} parent=11 // pred_fallthru
          _
        // Predicated region
        $region57: #{tpu_custom_call.1} parent=11 // pred_check
          %p401 = pneg %p327
        $region58: #{tpu_custom_call.1} parent=11 // pred_check_branch
          %403 = sbr.rel (%p401) target = $region60
        $region59: #{tpu_custom_call.1} parent=11 // pred_region
          _
        $region60: #{tpu_custom_call.1} parent=11 // pred_fallthru
          _
      $region12: #{tpu_custom_call.1} parent=5 // pred_fallthru
        _
      %p404 = scmp.lt.s32.totalorder %s23, 2
      // Predicated region
      $region61: #{tpu_custom_call.1} parent=5 // pred_check
        %p405 = pneg %p404
      $region62: #{tpu_custom_call.1} parent=5 // pred_check_branch
        %407 = sbr.rel (%p405) target = $region64
      $region63: #{tpu_custom_call.1} parent=5 // pred_region
        // Predicated region
        $region65: #{tpu_custom_call.1} parent=63 // pred_check
          %p408 = pneg %p43
        $region66: #{tpu_custom_call.1} parent=63 // pred_check_branch
          %410 = sbr.rel (%p408) target = $region68
        $region67: #{tpu_custom_call.1} parent=63 // pred_region
          %p411 = scmp.lt.s32.totalorder %s23, 1
          %s412 = scalar_select %p411, %s23, 1
          %s413 = smul.addr %s412, 8
          %s414 = scalar_lea.vmem %s0, %s413
        $region68: #{tpu_custom_call.1} parent=63 // pred_fallthru
          _
        // Predicated region
        $region69: #{tpu_custom_call.1} parent=63 // pred_check
          %p415 = pneg %p69
        $region70: #{tpu_custom_call.1} parent=63 // pred_check_branch
          %417 = sbr.rel (%p415) target = $region72
        $region71: #{tpu_custom_call.1} parent=63 // pred_region
          %p418 = scmp.lt.s32.totalorder %s23, 1
          %s419 = scalar_select %p418, %s23, 1
          %s420 = smul.addr %s419, 8
          %s421 = scalar_lea.vmem %s1, %s420
        $region72: #{tpu_custom_call.1} parent=63 // pred_fallthru
          _
      $region64: #{tpu_custom_call.1} parent=5 // pred_fallthru
        _
      %p422 = scmp.le.s32.totalorder 1, %s23
      %p423 = scmp.lt.s32.totalorder %s23, 3
      %p424 = pnand %p422, %p423
      %p425 = pneg %p424
      // Predicated region
      $region73: #{tpu_custom_call.1} parent=5 // pred_check
        _
      $region74: #{tpu_custom_call.1} parent=5 // pred_check_branch
        %427 = sbr.rel (%p424) target = $region76
      $region75: #{tpu_custom_call.1} parent=5 // pred_region
        %s428 = ssub.s32 %s23, 1
        %p429 = scmp.lt.s32.totalorder %s28, 1
        %s430 = scalar_select %p429, %s28, 1
        %s431 = smul.addr %s430, 8
        %s432 = scalar_lea.vmem %s0, %s431
        %p433 = pneg %p49
        %p434 = pneg %p46
        %p435 = scmp.lt.s32.totalorder %s28, 1
        %s436 = scalar_select %p435, %s28, 1
        %s437 = smul.addr %s436, 8
        %s438 = scalar_lea.vmem %s1, %s437
        %p439 = pneg %p75
        %p440 = pneg %p72
        %p441 = pneg %p96
        %p442 = pneg %p93
        %p443 = pneg %p117
        %p444 = pneg %p114
        %p445 = pneg %p138
        %p446 = pneg %p135
        %p447 = pneg %p159
        %p448 = pneg %p156
        %p449 = pneg %p180
        %p450 = pneg %p177
        %p451 = pneg %p201
        %p452 = pneg %p198
        %p453 = pneg %p222
        %p454 = pneg %p219
        %p455 = pneg %p243
        %p456 = pneg %p240
        %p457 = pneg %p264
        %p458 = pneg %p261
        %p459 = pneg %p285
        %p460 = pneg %p282
        %p461 = pneg %p306
        %p462 = pneg %p303
        %p463 = pneg %p327
        %p464 = pneg %p324
        %p465 = pneg %p353
        %p466 = pneg %p350
        %s467 = sand.u32 %s340, 1
        %s468 = scalar_lea.sflag [#allocation3], %s467
        %s469 = sand.u32 %s340, 1
        %s470 = smul.addr %s469, 8
        %s471 = scalar_lea.vmem [#allocation2], %s470
        %p472 = scmp.lt.s32.totalorder %s28, 1
        %s473 = scalar_select %p472, %s28, 1
        %s474 = smul.addr %s473, 8
        %s475 = scalar_lea.vmem %s0, %s474
        %p476 = scmp.lt.s32.totalorder %s28, 1
        %s477 = scalar_select %p476, %s28, 1
        %s478 = smul.addr %s477, 8
        %s479 = scalar_lea.vmem %s1, %s478
        %v480 = vld [vmem:[%s475] sm:$0xff]
        %v481 = vld [vmem:[%s479] sm:$0xff]
        %v482 = vld [vmem:[%s2] sm:$0xff]
        %v483 = vld [vmem:[%s2 + $0x8] sm:$0xff]
        %v484 = vld [vmem:[%s2 + $0x10] sm:$0xff]
        %v485 = vld [vmem:[%s2 + $0x18] sm:$0xff]
        %v486 = vld [vmem:[%s3] sm:$0x1]
        %v488 = vperm.slane %v486, 0
        %vm490 = vcmask 261120
        %v492 = vsel %vm490, %v480, 0
        %494 = vmatpush.msra.mxu0 0.0
        %495 = vmatpush.msra.mxu0 0.0
        %496 = vmatpush.msra.mxu0 0.0
        %497 = vmatpush.msra.mxu0 0.0
        %498 = vmatpush.msra.mxu0 0.0
        %499 = vmatpush.msra.mxu0 0.0
        %500 = vmatpush.msra.mxu0 0.0
        %501 = vmatpush.msra.mxu0 0.0
        %502 = vmatpush.msra.mxu0 0.0
        %503 = vmatpush.msra.mxu0 0.0
        %504 = vmatpush.msra.mxu0 0.0
        %505 = vmatpush.msra.mxu0 0.0
        %506 = vmatpush.msra.mxu0 %v485
        %507 = vmatpush.msra.mxu0 %v484
        %508 = vmatpush.msra.mxu0 %v483
        %509 = vmatpush.msra.mxu0 %v482
        %510 = vmatmul.f32.gmra.mxu0 %v492
        %v511 = vpop.f32.mrf.mxu0
        %v512 = vadd.f32 %v488, %v511
        %513 = vdwg.mxu0
        %515 = vrot.lane.b32.xlu0 %v512, 96
        %v516 = vpop.permute.xlu0 %515
        %vm517 = vcmask 130048
        %v518 = vsel %vm517, %v512, 0
        %v520 = vsel %vm517, %v516, 0
        %522 = vmatpush.xpose.msra.mxu0 0.0
        %523 = vmatpush.xpose.msra.mxu0 0.0
        %524 = vmatpush.xpose.msra.mxu0 0.0
        %525 = vmatpush.xpose.msra.mxu0 0.0
        %526 = vmatpush.xpose.msra.mxu0 0.0
        %527 = vmatpush.xpose.msra.mxu0 0.0
        %528 = vmatpush.xpose.msra.mxu0 0.0
        %529 = vmatpush.xpose.msra.mxu0 0.0
        %530 = vmatpush.xpose.msra.mxu0 0.0
        %531 = vmatpush.xpose.msra.mxu0 0.0
        %532 = vmatpush.xpose.msra.mxu0 0.0
        %533 = vmatpush.xpose.msra.mxu0 0.0
        %534 = vmatpush.xpose.msra.mxu0 0.0
        %535 = vmatpush.xpose.msra.mxu0 0.0
        %536 = vmatpush.xpose.msra.mxu0 0.0
        %537 = vmatpush.xpose.msra.mxu0 %v520
        %538 = vmatmul.f32.gmra.mxu0 %v518
        %v539 = vpop.f32.mrf.mxu0
        %v540 = vadd.f32 0.0, %v539
        %541 = vdwg.mxu0
        %v542 = vmul.f32 %v540, 0.17677669
        %vm543 = vcmp.gt.f32.partialorder %v481, 0.5
        %v544 = vsel %vm543, 1, 0
        %545 = vset.pattern.permute.xlu0 0
        %546 = vperm.xlu0 %545, %v544
        %v547 = vpop.permute.xlu0 %546
        %vm548 = vcmp.eq.s32.totalorder %v547, 1
        %v549 = vsel %vm548, %v542, -1e+09
        %vm550 = vcmask 64512
        %v551 = vsel %vm550, %v549, -inf
        %552 = vmax.xlane.f32.xlu0 %v551
        %v553 = vpop.xlane.xlu0 %552
        %v554 = vsub.f32 %v549, %v553
        %v555 = vmul.f32 %v554, 1.442695
        %v556 = vpow.pop %v555
        %v557 = vsel %vm550, %v556, 0.0
        %558 = vadd.xlane.f32.xlu0 %v557
        %v559 = vpop.xlane.xlu0 %558
        %v560 = vrcp.pop %v559
        %v561 = vmul.f32 %v556, %v560
        %562 = vrot.lane.b32.xlu0 %v512, 64
        %v563 = vpop.permute.xlu0 %562
        %v566 = vsel %vm550, %v561, 0
        %568 = vmatpush.msra.mxu0 0.0
        %569 = vmatpush.msra.mxu0 0.0
        %570 = vmatpush.msra.mxu0 0.0
        %571 = vmatpush.msra.mxu0 0.0
        %572 = vmatpush.msra.mxu0 0.0
        %573 = vmatpush.msra.mxu0 0.0
        %574 = vmatpush.msra.mxu0 0.0
        %575 = vmatpush.msra.mxu0 0.0
        %576 = vmatpush.msra.mxu0 0.0
        %577 = vmatpush.msra.mxu0 0.0
        %578 = vmatpush.msra.mxu0 0.0
        %579 = vmatpush.msra.mxu0 0.0
        %580 = vmatpush.msra.mxu0 0.0
        %581 = vmatpush.msra.mxu0 0.0
        %582 = vmatpush.msra.mxu0 0.0
        %583 = vmatpush.msra.mxu0 %v563
        %584 = vmatmul.f32.gmra.mxu0 %v566
        %v585 = vpop.f32.mrf.mxu0
        %v586 = vadd.f32 0.0, %v585
        %587 = vdwg.mxu0
        %v588 = vld [vmem:[%s4] sm:$0xff]
        %v589 = vld [vmem:[%s4 + $0x8] sm:$0xff]
        %590 = vrot.lane.b32.xlu0 %v512, 112
        %v591 = vpop.permute.xlu0 %590
        %592 = vrot.lane.b32.xlu0 %v512, 80
        %v593 = vpop.permute.xlu0 %592
        %v594 = vsel %vm517, %v591, 0
        %v596 = vsel %vm517, %v593, 0
        %598 = vmatpush.xpose.msra.mxu0 0.0
        %599 = vmatpush.xpose.msra.mxu0 0.0
        %600 = vmatpush.xpose.msra.mxu0 0.0
        %601 = vmatpush.xpose.msra.mxu0 0.0
        %602 = vmatpush.xpose.msra.mxu0 0.0
        %603 = vmatpush.xpose.msra.mxu0 0.0
        %604 = vmatpush.xpose.msra.mxu0 0.0
        %605 = vmatpush.xpose.msra.mxu0 0.0
        %606 = vmatpush.xpose.msra.mxu0 0.0
        %607 = vmatpush.xpose.msra.mxu0 0.0
        %608 = vmatpush.xpose.msra.mxu0 0.0
        %609 = vmatpush.xpose.msra.mxu0 0.0
        %610 = vmatpush.xpose.msra.mxu0 0.0
        %611 = vmatpush.xpose.msra.mxu0 0.0
        %612 = vmatpush.xpose.msra.mxu0 0.0
        %613 = vmatpush.xpose.msra.mxu0 %v596
        %614 = vmatmul.f32.gmra.mxu0 %v594
        %v615 = vpop.f32.mrf.mxu0
        %v616 = vadd.f32 0.0, %v615
        %617 = vdwg.mxu0
        %v618 = vmul.f32 %v616, 0.17677669
        %v619 = vsel %vm548, %v618, -1e+09
        %v620 = vsel %vm550, %v619, -inf
        %621 = vmax.xlane.f32.xlu0 %v620
        %v622 = vpop.xlane.xlu0 %621
        %v623 = vsub.f32 %v619, %v622
        %v624 = vmul.f32 %v623, 1.442695
        %v625 = vpow.pop %v624
        %v626 = vsel %vm550, %v625, 0.0
        %627 = vadd.xlane.f32.xlu0 %v626
        %v628 = vpop.xlane.xlu0 %627
        %v629 = vrcp.pop %v628
        %v630 = vmul.f32 %v625, %v629
        %631 = vrot.lane.b32.xlu0 %v512, 48
        %v632 = vpop.permute.xlu0 %631
        %v635 = vsel %vm550, %v630, 0
        %637 = vmatpush.msra.mxu0 0.0
        %638 = vmatpush.msra.mxu0 0.0
        %639 = vmatpush.msra.mxu0 0.0
        %640 = vmatpush.msra.mxu0 0.0
        %641 = vmatpush.msra.mxu0 0.0
        %642 = vmatpush.msra.mxu0 0.0
        %643 = vmatpush.msra.mxu0 0.0
        %644 = vmatpush.msra.mxu0 0.0
        %645 = vmatpush.msra.mxu0 0.0
        %646 = vmatpush.msra.mxu0 0.0
        %647 = vmatpush.msra.mxu0 0.0
        %648 = vmatpush.msra.mxu0 0.0
        %649 = vmatpush.msra.mxu0 0.0
        %650 = vmatpush.msra.mxu0 0.0
        %651 = vmatpush.msra.mxu0 0.0
        %652 = vmatpush.msra.mxu0 %v632
        %653 = vmatmul.f32.gmra.mxu0 %v635
        %v654 = vpop.f32.mrf.mxu0
        %v655 = vadd.f32 0.0, %v654
        %656 = vdwg.mxu0
        %s657 = scalar_lea.vmem %s4, 16
        %v658 = vld [vmem:[%s657] sm:$0xff]
        %v659 = vld [vmem:[%s657 + $0x8] sm:$0xff]
        %v661 = vsel %vm517, %v655, 0
        %663 = vmatpush.msra.mxu0 0.0
        %664 = vmatpush.msra.mxu0 0.0
        %665 = vmatpush.msra.mxu0 0.0
        %666 = vmatpush.msra.mxu0 0.0
        %667 = vmatpush.msra.mxu0 0.0
        %668 = vmatpush.msra.mxu0 0.0
        %669 = vmatpush.msra.mxu0 0.0
        %670 = vmatpush.msra.mxu0 0.0
        %671 = vmatpush.msra.mxu0 0.0
        %672 = vmatpush.msra.mxu0 0.0
        %673 = vmatpush.msra.mxu0 0.0
        %674 = vmatpush.msra.mxu0 0.0
        %675 = vmatpush.msra.mxu0 0.0
        %676 = vmatpush.msra.mxu0 0.0
        %677 = vmatpush.msra.mxu0 %v659
        %678 = vmatpush.msra.mxu0 %v658
        %679 = vmatmul.f32.gmra.mxu0 %v661
        %v680 = vpop.f32.mrf.mxu0
        %v681 = vadd.f32 0.0, %v680
        %682 = vdwg.mxu0
        %v684 = vsel %vm517, %v586, 0
        %686 = vmatpush.msra.mxu0 0.0
        %687 = vmatpush.msra.mxu0 0.0
        %688 = vmatpush.msra.mxu0 0.0
        %689 = vmatpush.msra.mxu0 0.0
        %690 = vmatpush.msra.mxu0 0.0
        %691 = vmatpush.msra.mxu0 0.0
        %692 = vmatpush.msra.mxu0 0.0
        %693 = vmatpush.msra.mxu0 0.0
        %694 = vmatpush.msra.mxu0 0.0
        %695 = vmatpush.msra.mxu0 0.0
        %696 = vmatpush.msra.mxu0 0.0
        %697 = vmatpush.msra.mxu0 0.0
        %698 = vmatpush.msra.mxu0 0.0
        %699 = vmatpush.msra.mxu0 0.0
        %700 = vmatpush.msra.mxu0 %v589
        %701 = vmatpush.msra.mxu0 %v588
        %702 = vmatmul.f32.gmra.mxu0 %v684
        %v703 = vpop.f32.mrf.mxu0
        %v704 = vadd.f32 %v681, %v703
        %705 = vdwg.mxu0
        %v706 = vld [vmem:[%s5] sm:$0x1]
        %v708 = vperm.slane %v706, 0
        %v710 = vadd.f32 %v704, %v708
        %v711 = vadd.f32 %v710, %v480
        %v712 = vld [vmem:[%s6] sm:$0x1]
        %v713 = vld [vmem:[%s7] sm:$0x1]
        %v714 = vsel %vm490, %v711, 0.0
        %715 = vadd.xlane.f32.xlu0 %v714
        %v716 = vpop.xlane.xlu0 %715
        %v717 = vrcp.pop 32.0
        %v718 = vmul.f32 32.0, %v717
        %v719 = vsub.f32 1.0, %v718
        %v720 = vmul.f32 %v717, %v719
        %v721 = vadd.f32 %v717, %v720
        %vm722 = vweird.f32 %v717
        %v723 = vsel %vm722, %v717, %v721
        %v724 = vmul.f32 %v716, %v723
        %v725 = vsub.f32 %v711, %v724
        %v726 = vmul.f32 %v725, %v725
        %v727 = vsel %vm490, %v726, 0.0
        %728 = vadd.xlane.f32.xlu0 %v727
        %v729 = vpop.xlane.xlu0 %728
        %v730 = vmul.f32 %v729, %v723
        %v731 = vadd.f32 %v730, 1e-05
        %v732 = vrsqrt.pop %v731
        %v733 = vmul.f32 %v732, %v731
        %v734 = vmul.f32 %v733, %v732
        %v735 = vmul.f32 0.5, %v734
        %v736 = vsub.f32 1.5, %v735
        %v737 = vmul.f32 %v732, %v736
        %vm738 = vweird.f32 %v731
        %vm739 = vweird.f32 %v732
        %vm740 = vmor %vm738, %vm739
        %v741 = vsel %vm740, %v732, %v737
        %v742 = vmul.f32 %v725, %v741
        %v744 = vperm.slane %v712, 0
        %v746 = vmul.f32 %v742, %v744
        %v748 = vperm.slane %v713, 0
        %v750 = vadd.f32 %v746, %v748
        %v751 = vld [vmem:[%s9] sm:$0x1]
        %v753 = vrot.slane %v750, 7
        %vm755 = vcmask 1040384
        %v756 = vsel %vm755, 0.0, %v753
        %v757 = vld [vmem:[%s8] sm:$0xff]
        %v758 = vld [vmem:[%s8 + $0x8] sm:$0xff]
        %v759 = vld [vmem:[%s8 + $0x10] sm:$0xff]
        %v760 = vld [vmem:[%s8 + $0x18] sm:$0xff]
        %s761 = scalar_lea.vmem %s8, 32
        %v762 = vld [vmem:[%s761] sm:$0xff]
        %v763 = vld [vmem:[%s761 + $0x8] sm:$0xff]
        %v764 = vld [vmem:[%s761 + $0x10] sm:$0xff]
        %v765 = vld [vmem:[%s761 + $0x18] sm:$0xff]
        %v766 = vsel %vm490, %v750, 0
        %768 = vmatpush.msra.mxu0 0.0
        %769 = vmatpush.msra.mxu0 0.0
        %770 = vmatpush.msra.mxu0 0.0
        %771 = vmatpush.msra.mxu0 0.0
        %772 = vmatpush.msra.mxu0 0.0
        %773 = vmatpush.msra.mxu0 0.0
        %774 = vmatpush.msra.mxu0 0.0
        %775 = vmatpush.msra.mxu0 0.0
        %776 = vmatpush.msra.mxu0 0.0
        %777 = vmatpush.msra.mxu0 0.0
        %778 = vmatpush.msra.mxu0 0.0
        %779 = vmatpush.msra.mxu0 0.0
        %780 = vmatpush.msra.mxu0 %v765
        %781 = vmatpush.msra.mxu0 %v764
        %782 = vmatpush.msra.mxu0 %v763
        %783 = vmatpush.msra.mxu0 %v762
        %784 = vmatmul.f32.gmra.mxu0 %v766
        %v785 = vpop.f32.mrf.mxu0
        %v786 = vadd.f32 0.0, %v785
        %787 = vdwg.mxu0
        %v789 = vsel %vm490, %v756, 0
        %791 = vmatpush.msra.mxu0 0.0
        %792 = vmatpush.msra.mxu0 0.0
        %793 = vmatpush.msra.mxu0 0.0
        %794 = vmatpush.msra.mxu0 0.0
        %795 = vmatpush.msra.mxu0 0.0
        %796 = vmatpush.msra.mxu0 0.0
        %797 = vmatpush.msra.mxu0 0.0
        %798 = vmatpush.msra.mxu0 0.0
        %799 = vmatpush.msra.mxu0 0.0
        %800 = vmatpush.msra.mxu0 0.0
        %801 = vmatpush.msra.mxu0 0.0
        %802 = vmatpush.msra.mxu0 0.0
        %803 = vmatpush.msra.mxu0 %v760
        %804 = vmatpush.msra.mxu0 %v759
        %805 = vmatpush.msra.mxu0 %v758
        %806 = vmatpush.msra.mxu0 %v757
        %807 = vmatmul.f32.gmra.mxu0 %v789
        %v808 = vpop.f32.mrf.mxu0
        %v809 = vadd.f32 %v786, %v808
        %810 = vdwg.mxu0
        %v811 = vrot.slane %v750, 1
        %vm813 = vcmask 1046528
        %v814 = vsel %vm813, %v811, 0.0
        %s815 = scalar_lea.vmem %s8, 64
        %v816 = vld [vmem:[%s815] sm:$0xff]
        %v817 = vld [vmem:[%s815 + $0x8] sm:$0xff]
        %v818 = vld [vmem:[%s815 + $0x10] sm:$0xff]
        %v819 = vld [vmem:[%s815 + $0x18] sm:$0xff]
        %v821 = vsel %vm490, %v814, 0
        %823 = vmatpush.msra.mxu0 0.0
        %824 = vmatpush.msra.mxu0 0.0
        %825 = vmatpush.msra.mxu0 0.0
        %826 = vmatpush.msra.mxu0 0.0
        %827 = vmatpush.msra.mxu0 0.0
        %828 = vmatpush.msra.mxu0 0.0
        %829 = vmatpush.msra.mxu0 0.0
        %830 = vmatpush.msra.mxu0 0.0
        %831 = vmatpush.msra.mxu0 0.0
        %832 = vmatpush.msra.mxu0 0.0
        %833 = vmatpush.msra.mxu0 0.0
        %834 = vmatpush.msra.mxu0 0.0
        %835 = vmatpush.msra.mxu0 %v819
        %836 = vmatpush.msra.mxu0 %v818
        %837 = vmatpush.msra.mxu0 %v817
        %838 = vmatpush.msra.mxu0 %v816
        %839 = vmatmul.f32.gmra.mxu0 %v821
        %v840 = vpop.f32.mrf.mxu0
        %v841 = vadd.f32 0.0, %v840
        %842 = vdwg.mxu0
        %v843 = vadd.f32 %v809, %v841
        %v845 = vperm.slane %v751, 0
        %v847 = vadd.f32 %v843, %v845
        %v848 = vmax.f32 %v847, 0.0
        %v849 = vld [vmem:[%s11] sm:$0x1]
        %v851 = vrot.slane %v848, 7
        %v853 = vsel %vm755, 0.0, %v851
        %v854 = vld [vmem:[%s10] sm:$0xff]
        %v855 = vld [vmem:[%s10 + $0x8] sm:$0xff]
        %v856 = vld [vmem:[%s10 + $0x10] sm:$0xff]
        %v857 = vld [vmem:[%s10 + $0x18] sm:$0xff]
        %v858 = vld [vmem:[%s10 + $0x20] sm:$0xff]
        %v859 = vld [vmem:[%s10 + $0x28] sm:$0xff]
        %v860 = vld [vmem:[%s10 + $0x30] sm:$0xff]
        %v861 = vld [vmem:[%s10 + $0x38] sm:$0xff]
        %s862 = scalar_lea.vmem %s10, 64
        %v863 = vld [vmem:[%s862] sm:$0xff]
        %v864 = vld [vmem:[%s862 + $0x8] sm:$0xff]
        %v865 = vld [vmem:[%s862 + $0x10] sm:$0xff]
        %v866 = vld [vmem:[%s862 + $0x18] sm:$0xff]
        %v867 = vld [vmem:[%s862 + $0x20] sm:$0xff]
        %v868 = vld [vmem:[%s862 + $0x28] sm:$0xff]
        %v869 = vld [vmem:[%s862 + $0x30] sm:$0xff]
        %v870 = vld [vmem:[%s862 + $0x38] sm:$0xff]
        %vm871 = vcmask 523264
        %v872 = vsel %vm871, %v848, 0
        %874 = vmatpush.msra.mxu0 0.0
        %875 = vmatpush.msra.mxu0 0.0
        %876 = vmatpush.msra.mxu0 0.0
        %877 = vmatpush.msra.mxu0 0.0
        %878 = vmatpush.msra.mxu0 0.0
        %879 = vmatpush.msra.mxu0 0.0
        %880 = vmatpush.msra.mxu0 0.0
        %881 = vmatpush.msra.mxu0 0.0
        %882 = vmatpush.msra.mxu0 %v870
        %883 = vmatpush.msra.mxu0 %v869
        %884 = vmatpush.msra.mxu0 %v868
        %885 = vmatpush.msra.mxu0 %v867
        %886 = vmatpush.msra.mxu0 %v866
        %887 = vmatpush.msra.mxu0 %v865
        %888 = vmatpush.msra.mxu0 %v864
        %889 = vmatpush.msra.mxu0 %v863
        %890 = vmatmul.f32.gmra.mxu0 %v872
        %v891 = vpop.f32.mrf.mxu0
        %v892 = vadd.f32 0.0, %v891
        %893 = vdwg.mxu0
        %v895 = vsel %vm871, %v853, 0
        %897 = vmatpush.msra.mxu0 0.0
        %898 = vmatpush.msra.mxu0 0.0
        %899 = vmatpush.msra.mxu0 0.0
        %900 = vmatpush.msra.mxu0 0.0
        %901 = vmatpush.msra.mxu0 0.0
        %902 = vmatpush.msra.mxu0 0.0
        %903 = vmatpush.msra.mxu0 0.0
        %904 = vmatpush.msra.mxu0 0.0
        %905 = vmatpush.msra.mxu0 %v861
        %906 = vmatpush.msra.mxu0 %v860
        %907 = vmatpush.msra.mxu0 %v859
        %908 = vmatpush.msra.mxu0 %v858
        %909 = vmatpush.msra.mxu0 %v857
        %910 = vmatpush.msra.mxu0 %v856
        %911 = vmatpush.msra.mxu0 %v855
        %912 = vmatpush.msra.mxu0 %v854
        %913 = vmatmul.f32.gmra.mxu0 %v895
        %v914 = vpop.f32.mrf.mxu0
        %v915 = vadd.f32 %v892, %v914
        %916 = vdwg.mxu0
        %v917 = vrot.slane %v848, 1
        %v919 = vsel %vm813, %v917, 0.0
        %s920 = scalar_lea.vmem %s10, 128
        %v921 = vld [vmem:[%s920] sm:$0xff]
        %v922 = vld [vmem:[%s920 + $0x8] sm:$0xff]
        %v923 = vld [vmem:[%s920 + $0x10] sm:$0xff]
        %v924 = vld [vmem:[%s920 + $0x18] sm:$0xff]
        %v925 = vld [vmem:[%s920 + $0x20] sm:$0xff]
        %v926 = vld [vmem:[%s920 + $0x28] sm:$0xff]
        %v927 = vld [vmem:[%s920 + $0x30] sm:$0xff]
        %v928 = vld [vmem:[%s920 + $0x38] sm:$0xff]
        %v930 = vsel %vm871, %v919, 0
        %932 = vmatpush.msra.mxu0 0.0
        %933 = vmatpush.msra.mxu0 0.0
        %934 = vmatpush.msra.mxu0 0.0
        %935 = vmatpush.msra.mxu0 0.0
        %936 = vmatpush.msra.mxu0 0.0
        %937 = vmatpush.msra.mxu0 0.0
        %938 = vmatpush.msra.mxu0 0.0
        %939 = vmatpush.msra.mxu0 0.0
        %940 = vmatpush.msra.mxu0 %v928
        %941 = vmatpush.msra.mxu0 %v927
        %942 = vmatpush.msra.mxu0 %v926
        %943 = vmatpush.msra.mxu0 %v925
        %944 = vmatpush.msra.mxu0 %v924
        %945 = vmatpush.msra.mxu0 %v923
        %946 = vmatpush.msra.mxu0 %v922
        %947 = vmatpush.msra.mxu0 %v921
        %948 = vmatmul.f32.gmra.mxu0 %v930
        %v949 = vpop.f32.mrf.mxu0
        %v950 = vadd.f32 0.0, %v949
        %951 = vdwg.mxu0
        %v952 = vadd.f32 %v915, %v950
        %v954 = vperm.slane %v849, 0
        %v956 = vadd.f32 %v952, %v954
        %v957 = vadd.f32 %v956, %v750
        %v958 = vld [vmem:[%s12] sm:$0x1]
        %v959 = vld [vmem:[%s13] sm:$0x1]
        %v960 = vsel %vm490, %v957, 0.0
        %961 = vadd.xlane.f32.xlu0 %v960
        %v962 = vpop.xlane.xlu0 %961
        %v963 = vmul.f32 %v962, %v723
        %v964 = vsub.f32 %v957, %v963
        %v965 = vmul.f32 %v964, %v964
        %v966 = vsel %vm490, %v965, 0.0
        %967 = vadd.xlane.f32.xlu0 %v966
        %v968 = vpop.xlane.xlu0 %967
        %v969 = vmul.f32 %v968, %v723
        %v970 = vadd.f32 %v969, 1e-05
        %v971 = vrsqrt.pop %v970
        %v972 = vmul.f32 %v971, %v970
        %v973 = vmul.f32 %v972, %v971
        %v974 = vmul.f32 0.5, %v973
        %v975 = vsub.f32 1.5, %v974
        %v976 = vmul.f32 %v971, %v975
        %vm977 = vweird.f32 %v970
        %vm978 = vweird.f32 %v971
        %vm979 = vmor %vm977, %vm978
        %v980 = vsel %vm979, %v971, %v976
        %v981 = vmul.f32 %v964, %v980
        %v983 = vperm.slane %v958, 0
        %v985 = vmul.f32 %v981, %v983
        %v987 = vperm.slane %v959, 0
        %v989 = vadd.f32 %v985, %v987
        %990 = vst.msk [vmem:[%s471] sm:$0xff] %vm490, %v989
        %s991 = sand.u32 %s340, 1
        %s992 = scalar_lea.sflag [#allocation3], %s991
        %s993 = sand.u32 %s340, 1
        %s994 = smul.addr %s993, 8
        %s995 = scalar_lea.vmem [#allocation2], %s994
        // Predicated region
        $region77: #{tpu_custom_call.1} parent=75 // pred_check
          %p996 = pneg %p350
        $region78: #{tpu_custom_call.1} parent=75 // pred_check_branch
          %998 = sbr.rel (%p996) target = $region80
        $region79: #{tpu_custom_call.1} parent=75 // pred_region
          %1000 = vsyncadd %s992, 0
          %s1001 = smul.addr %s28, 8
          %s1002 = scalar_lea.hbm %s14, %s1001
          %s1004 = sshll.u32 %s995, 4
          %s1005 = int_to_ptr.vmem [resolvable:$true] %s1004
          %s1006 = sshll.u32 %s1002, 4
          %s1007 = int_to_ptr.hbm [resolvable:$true] %s1006
          %1009 = dma.vmem_to_hbm [thread:$0]  %s1005, 128, %s1007, %s992
        $region80: #{tpu_custom_call.1} parent=75 // pred_fallthru
          _
      $region76: #{tpu_custom_call.1} parent=5 // pred_fallthru
        _
      %p1010 = scmp.le.s32.totalorder 2, %s23
      // Predicated region
      $region81: #{tpu_custom_call.1} parent=5 // pred_check
        %p1011 = pneg %p1010
      $region82: #{tpu_custom_call.1} parent=5 // pred_check_branch
        %1013 = sbr.rel (%p1011) target = $region84
      $region83: #{tpu_custom_call.1} parent=5 // pred_region
        %s1014 = ssub.s32 %s23, 2
        // Predicated region
        $region85: #{tpu_custom_call.1} parent=83 // pred_check
          %p1015 = pneg %p356
        $region86: #{tpu_custom_call.1} parent=83 // pred_check_branch
          %1017 = sbr.rel (%p1015) target = $region88
        $region87: #{tpu_custom_call.1} parent=83 // pred_region
          %s1018 = sand.u32 %s341, 1
          %s1019 = scalar_lea.sflag [#allocation3], %s1018
          %s1020 = sand.u32 %s341, 1
          %s1021 = smul.addr %s1020, 8
          %s1022 = scalar_lea.vmem [#allocation2], %s1021
          %1024 = dma.done %s1019, 128
        $region88: #{tpu_custom_call.1} parent=83 // pred_fallthru
          _
      $region84: #{tpu_custom_call.1} parent=5 // pred_fallthru
        _
    $region6: #{tpu_custom_call.1} parent=1 // loop_footer
      %s27 = sadd.s32 1, %s23
    $region7: #{tpu_custom_call.1} parent=1 // loop_footer_branch
      %22 = sbr.rel target = $region3
    $region8: #{tpu_custom_call.1} parent=1 // loop_exit
      _
    %1025 = vsyncpa [#allocation3], 1
    %s1026 = scalar_lea.sflag [#allocation3], 1
    %1027 = vsyncpa %s1026, 1

</llo_original>
